<compile_context>
chip_gen: v5e
topology: v5e:2x2
jax: 0.10.0
libtpu: 0.0.40
codegen_flags: <defaults>
</compile_context>

<pallas_src>
import functools

import jax
import jax.numpy as jnp
from jax.experimental import pallas as pl
from jax.experimental.pallas import tpu as pltpu


# --------------------------- wrapper-side helpers ---------------------------

def _conv_toeplitz(weight, ow_out, pos_stride, n_rows):
    """Per-kh banded RHS matrices for a 5x5 'valid' convolution.

    weight: (OC, C, KH, KW).  Returns T of shape (KH, n_rows, ow_out*OC) with
        T[kh, pos_stride*(ow+kw) + c, ow*OC + oc] = weight[oc, c, kh, kw]
    and zeros elsewhere, so for an activation matrix A whose lane index is
    L = pos_stride*w + c (c minor):
        (A[r] @ T[kh])[ow*OC + oc] = sum_{kw,c} A[r, pos_stride*(ow+kw)+c]
                                                * weight[oc, c, kh, kw]
    """
    oc_n, c_n, kh_n, kw_n = weight.shape
    wt = jnp.transpose(weight, (2, 1, 3, 0)).astype(jnp.float32)  # (KH,C,KW,OC)
    t = jnp.zeros((kh_n, n_rows, ow_out * oc_n), jnp.float32)
    ow = jnp.arange(ow_out)
    cin = jnp.arange(c_n)
    oc = jnp.arange(oc_n)
    for kw in range(kw_n):
        rows = pos_stride * (ow[:, None, None] + kw) + cin[None, :, None]
        cols = ow[:, None, None] * oc_n + oc[None, None, :]
        vals = jnp.broadcast_to(wt[:, None, :, kw, :],
                                (kh_n, ow_out, c_n, oc_n))
        t = t.at[:, rows, cols].set(vals)
    return t


def _row_select(n_keep, n_rows):
    """(n_keep, n_rows) 0/1 matrix selecting rows 0, 2, 4, ... (stride-2)."""
    i = jnp.arange(n_keep)
    return jnp.zeros((n_keep, n_rows), jnp.float32).at[i, 2 * i].set(1.0)


def _lane_select(pw, oc, n_rows):
    """(n_rows, pw*oc) 0/1 matrix compacting lane 2*w*oc + c -> w*oc + c."""
    w = jnp.arange(pw)[:, None]
    c = jnp.arange(oc)[None, :]
    rows = (2 * w * oc + c).reshape(-1)
    cols = (w * oc + c).reshape(-1)
    return jnp.zeros((n_rows, pw * oc), jnp.float32).at[rows, cols].set(1.0)


# --------------------------------- kernel ----------------------------------

def _conv5_pool2_relu(a, t_ref, b_row, oc):
    """conv(k=5, valid) -> 2x2/2 max-pool -> (+bias) -> ReLU.

    a:     (H_in, L_in) activation rows, lane index = (w, c) with c minor.
    t_ref: (5, L_in, OW*OC) per-kh banded weight matrices.
    b_row: (1, (OW-1)*OC) bias row (bias applied post-pool == pre-pool here).
    Returns an UNCOMPACTED pooled activation of shape (OH-1, (OW-1)*OC) whose
    valid entries sit at even rows / even ow lane-groups; the stride-2
    selection is absorbed by the consumer (next layer's Toeplitz rows or the
    final 0/1 selection matmuls).
    """
    kh_n = t_ref.shape[0]
    oh = a.shape[0] - (kh_n - 1)
    conv = jnp.dot(a[0:oh, :], t_ref[0], preferred_element_type=jnp.float32)
    for kh in range(1, kh_n):
        conv = conv + jnp.dot(a[kh:kh + oh, :], t_ref[kh],
                              preferred_element_type=jnp.float32)
    wmax = jnp.maximum(conv[:, :-oc], conv[:, oc:])    # pool adjacent ow pairs
    hmax = jnp.maximum(wmax[:-1, :], wmax[1:, :])      # pool adjacent oh pairs
    return jnp.maximum(hmax + b_row, 0.0)              # bias post-pool + ReLU


def _fed_contrastive_kernel(x_ref, t1_ref, b1_ref, t2_ref, b2_ref,
                            s1_ref, s2_ref, csel_ref, out_ref, *, oc1, oc2):
    b1row = b1_ref[...]
    b2row = b2_ref[...]
    s1 = s1_ref[...]
    s2 = s2_ref[...]
    csel = csel_ref[...]
    for b in range(x_ref.shape[0]):       # static unroll: images per grid step
        a1u = _conv5_pool2_relu(x_ref[b], t1_ref, b1row, oc1)
        a1 = jnp.dot(s1, a1u, preferred_element_type=jnp.float32)   # row compact
        # TODO(synk): conv2_drop (Dropout2d) undefined in reference __init__;
        # modeled as identity (eval-mode Dropout2d).
        a2u = _conv5_pool2_relu(a1, t2_ref, b2row, oc2)
        o = jnp.dot(s2, a2u, preferred_element_type=jnp.float32)    # rows
        o = jnp.dot(o, csel, preferred_element_type=jnp.float32)    # lanes
        out_ref[b] = o.astype(out_ref.dtype)


# -------------------------------- wrapper -----------------------------------

def fed_contrastive_forward(x_nchw, params):
    """Full forward.  Input NCHW (PyTorch convention); output NCHW."""
    w1, b1, w2, b2 = params
    n, c, h, w = x_nchw.shape
    oc1, oc2 = w1.shape[0], w2.shape[0]
    assert w1.shape[1:] == (c, 5, 5) and w2.shape[1:] == (oc1, 5, 5)

    oh1, ow1 = h - 4, w - 4                  # conv1 output
    assert oh1 % 2 == 0 and ow1 % 2 == 0
    ph1, pw1 = oh1 // 2, ow1 // 2            # pool1 output
    oh2, ow2 = ph1 - 4, pw1 - 4              # conv2 output
    assert oh2 % 2 == 0 and ow2 % 2 == 0
    ph2, pw2 = oh2 // 2, ow2 // 2            # pool2 output

    # ---- wrapper-side layout plumbing (weights -> banded matrices) ----
    x_rows = jnp.transpose(x_nchw, (0, 2, 3, 1)).reshape(n, h, w * c)
    t1 = _conv_toeplitz(w1, ow1, c, w * c)                     # (5, W*C, OW1*OC1)
    t2 = _conv_toeplitz(w2, ow2, 2 * oc1, (ow1 - 1) * oc1)     # (5, 230, OW2*OC2)
    b1row = jnp.tile(b1, ow1 - 1).reshape(1, (ow1 - 1) * oc1)
    b2row = jnp.tile(b2, ow2 - 1).reshape(1, (ow2 - 1) * oc2)
    s1 = _row_select(ph1, oh1 - 1)                             # (12, 23)
    s2 = _row_select(ph2, oh2 - 1)                             # (4, 7)
    csel = _lane_select(pw2, oc2, (ow2 - 1) * oc2)             # (140, 80)

    # ---- batching: several images per grid step; >=2 parallel steps when
    #      N >= 2 so both v7x TensorCores get work (harmless on v5e/v6e). ----
    bpg = 1 if n <= 1 else min(8, (n + 1) // 2)
    steps = (n + bpg - 1) // bpg
    n_pad = steps * bpg
    if n_pad != n:
        x_rows = jnp.pad(x_rows, ((0, n_pad - n), (0, 0), (0, 0)))

    kernel = functools.partial(_fed_contrastive_kernel, oc1=oc1, oc2=oc2)

    out = pl.pallas_call(
        kernel,
        out_shape=jax.ShapeDtypeStruct((n_pad, ph2, pw2 * oc2), jnp.float32),
        grid=(steps,),
        in_specs=[
            pl.BlockSpec((bpg, h, w * c), lambda i: (i, 0, 0)),
            pl.BlockSpec(t1.shape, lambda i: (0, 0, 0)),
            pl.BlockSpec(b1row.shape, lambda i: (0, 0)),
            pl.BlockSpec(t2.shape, lambda i: (0, 0, 0)),
            pl.BlockSpec(b2row.shape, lambda i: (0, 0)),
            pl.BlockSpec(s1.shape, lambda i: (0, 0)),
            pl.BlockSpec(s2.shape, lambda i: (0, 0)),
            pl.BlockSpec(csel.shape, lambda i: (0, 0)),
        ],
        out_specs=pl.BlockSpec((bpg, ph2, pw2 * oc2), lambda i: (i, 0, 0)),
        compiler_params=pltpu.CompilerParams(
            dimension_semantics=("parallel",)),
    )(x_rows, t1, b1row, t2, b2row, s1, s2, csel)

    out = out[:n].reshape(n, ph2, pw2, oc2)    # NHWC
    return jnp.transpose(out, (0, 3, 1, 2))    # NCHW


# ----------------------- pure-JAX reference + setup -----------------------

def _ref_layer(x_nchw, w, b):
    y = jax.lax.conv_general_dilated(
        x_nchw, w, window_strides=(1, 1), padding="VALID",
        dimension_numbers=("NCHW", "OIHW", "NCHW"))
    y = y + b[None, :, None, None]
    n, c, h, wd = y.shape
    y = y.reshape(n, c, h // 2, 2, wd // 2, 2).max(axis=(3, 5))
    return jnp.maximum(y, 0.0)


def _ref_forward(x_nchw, params):
    w1, b1, w2, b2 = params
    y = _ref_layer(x_nchw, w1, b1)
    y = _ref_layer(y, w2, b2)
    return y


def init_params(key, num_channels):
    k1, k2, k3, k4 = jax.random.split(key, 4)
    # Deterministic synthetic init (uniform, fan-in scaled), matching the
    # nn.Conv2d parameter shapes from __init__.
    s1 = 1.0 / (num_channels * 5 * 5) ** 0.5
    s2 = 1.0 / (10 * 5 * 5) ** 0.5
    w1 = jax.random.uniform(k1, (10, num_channels, 5, 5), jnp.float32, -s1, s1)
    b1 = jax.random.uniform(k2, (10,), jnp.float32, -s1, s1)
    w2 = jax.random.uniform(k3, (20, 10, 5, 5), jnp.float32, -s2, s2)
    b2 = jax.random.uniform(k4, (20,), jnp.float32, -s2, s2)
    return (w1, b1, w2, b2)


if __name__ == "__main__":
    key = jax.random.PRNGKey(0)
    kx, kp = jax.random.split(key)

    num_channels = 1                       # args.num_channels (MNIST-like)
    x = jax.random.normal(kx, (2, num_channels, 28, 28), jnp.float32)
    params = init_params(kp, num_channels)

    out = jax.jit(fed_contrastive_forward)(x, params)
    out = jax.block_until_ready(out)

    ref = _ref_forward(x, params)
    assert out.shape == (2, 20, 4, 4), out.shape
    assert jnp.allclose(out, ref, atol=1e-4, rtol=1e-4), (
        float(jnp.max(jnp.abs(out - ref))))

    print("KERNEL_OK")
</pallas_src>

<mosaic_0001>
module attributes {stable_mosaic.version = 11 : i64} {
  func.func @_fed_contrastive_kernel(%arg0: i32, %arg1: memref<1x28x28xf32, #tpu.memory_space<vmem>>, %arg2: memref<5x28x240xf32, #tpu.memory_space<vmem>>, %arg3: memref<1x230xf32, #tpu.memory_space<vmem>>, %arg4: memref<5x230x160xf32, #tpu.memory_space<vmem>>, %arg5: memref<1x140xf32, #tpu.memory_space<vmem>>, %arg6: memref<12x23xf32, #tpu.memory_space<vmem>>, %arg7: memref<4x7xf32, #tpu.memory_space<vmem>>, %arg8: memref<140x80xf32, #tpu.memory_space<vmem>>, %arg9: memref<1x4x80xf32, #tpu.memory_space<vmem>>) attributes {dimension_semantics = [#tpu.dimension_semantics<parallel>], iteration_bounds = array<i64: 2>, scalar_prefetch = 0 : i64, scratch_operands = 0 : i64, tpu.core_type = #tpu.core_type<tc>, window_params = [{transform_indices = @transform_0, window_bounds = array<i64: 1, 28, 28>}, {pipeline_mode = #tpu.pipeline_mode<synchronous>, transform_indices = @transform_1, window_bounds = array<i64: 5, 28, 240>}, {pipeline_mode = #tpu.pipeline_mode<synchronous>, transform_indices = @transform_2, window_bounds = array<i64: 1, 230>}, {pipeline_mode = #tpu.pipeline_mode<synchronous>, transform_indices = @transform_3, window_bounds = array<i64: 5, 230, 160>}, {pipeline_mode = #tpu.pipeline_mode<synchronous>, transform_indices = @transform_4, window_bounds = array<i64: 1, 140>}, {pipeline_mode = #tpu.pipeline_mode<synchronous>, transform_indices = @transform_5, window_bounds = array<i64: 12, 23>}, {pipeline_mode = #tpu.pipeline_mode<synchronous>, transform_indices = @transform_6, window_bounds = array<i64: 4, 7>}, {pipeline_mode = #tpu.pipeline_mode<synchronous>, transform_indices = @transform_7, window_bounds = array<i64: 140, 80>}, {transform_indices = @transform_8, window_bounds = array<i64: 1, 4, 80>}]} {
    %c0 = arith.constant 0 : index
    %c0_0 = arith.constant 0 : index
    %0 = vector.load %arg3[%c0, %c0_0] : memref<1x230xf32, #tpu.memory_space<vmem>>, vector<1x230xf32>
    %c0_1 = arith.constant 0 : index
    %c0_2 = arith.constant 0 : index
    %1 = vector.load %arg5[%c0_1, %c0_2] : memref<1x140xf32, #tpu.memory_space<vmem>>, vector<1x140xf32>
    %c0_3 = arith.constant 0 : index
    %c0_4 = arith.constant 0 : index
    %2 = vector.load %arg6[%c0_3, %c0_4] : memref<12x23xf32, #tpu.memory_space<vmem>>, vector<12x23xf32>
    %c0_5 = arith.constant 0 : index
    %c0_6 = arith.constant 0 : index
    %3 = vector.load %arg7[%c0_5, %c0_6] : memref<4x7xf32, #tpu.memory_space<vmem>>, vector<4x7xf32>
    %c0_7 = arith.constant 0 : index
    %c0_8 = arith.constant 0 : index
    %4 = vector.load %arg8[%c0_7, %c0_8] : memref<140x80xf32, #tpu.memory_space<vmem>>, vector<140x80xf32>
    %c0_9 = arith.constant 0 : index
    %c0_10 = arith.constant 0 : index
    %c0_11 = arith.constant 0 : index
    %5 = vector.load %arg1[%c0_9, %c0_10, %c0_11] : memref<1x28x28xf32, #tpu.memory_space<vmem>>, vector<1x28x28xf32>
    %6 = vector.shape_cast %5 : vector<1x28x28xf32> to vector<28x28xf32>
    %7 = vector.extract_strided_slice %6 {offsets = [0, 0], sizes = [24, 28], strides = [1, 1]} : vector<28x28xf32> to vector<24x28xf32>
    %c0_12 = arith.constant 0 : index
    %c0_13 = arith.constant 0 : index
    %c0_14 = arith.constant 0 : index
    %8 = vector.load %arg2[%c0_12, %c0_13, %c0_14] : memref<5x28x240xf32, #tpu.memory_space<vmem>>, vector<1x28x240xf32>
    %9 = vector.shape_cast %8 : vector<1x28x240xf32> to vector<28x240xf32>
    %cst = arith.constant dense<0.000000e+00> : vector<24x240xf32>
    %10 = tpu.matmul %7, %9, %cst {dimension_numbers = #tpu.dot_dimension_numbers<[1], [0], [0], [1], [0, 0, 1, 1], [], []>} : vector<24x28xf32>, vector<28x240xf32>, vector<24x240xf32> -> vector<24x240xf32>
    %11 = vector.extract_strided_slice %6 {offsets = [1, 0], sizes = [24, 28], strides = [1, 1]} : vector<28x28xf32> to vector<24x28xf32>
    %c1 = arith.constant 1 : index
    %c0_15 = arith.constant 0 : index
    %c0_16 = arith.constant 0 : index
    %12 = vector.load %arg2[%c1, %c0_15, %c0_16] : memref<5x28x240xf32, #tpu.memory_space<vmem>>, vector<1x28x240xf32>
    %13 = vector.shape_cast %12 : vector<1x28x240xf32> to vector<28x240xf32>
    %cst_17 = arith.constant dense<0.000000e+00> : vector<24x240xf32>
    %14 = tpu.matmul %11, %13, %cst_17 {dimension_numbers = #tpu.dot_dimension_numbers<[1], [0], [0], [1], [0, 0, 1, 1], [], []>} : vector<24x28xf32>, vector<28x240xf32>, vector<24x240xf32> -> vector<24x240xf32>
    %15 = arith.addf %10, %14 : vector<24x240xf32>
    %16 = vector.extract_strided_slice %6 {offsets = [2, 0], sizes = [24, 28], strides = [1, 1]} : vector<28x28xf32> to vector<24x28xf32>
    %c2 = arith.constant 2 : index
    %c0_18 = arith.constant 0 : index
    %c0_19 = arith.constant 0 : index
    %17 = vector.load %arg2[%c2, %c0_18, %c0_19] : memref<5x28x240xf32, #tpu.memory_space<vmem>>, vector<1x28x240xf32>
    %18 = vector.shape_cast %17 : vector<1x28x240xf32> to vector<28x240xf32>
    %cst_20 = arith.constant dense<0.000000e+00> : vector<24x240xf32>
    %19 = tpu.matmul %16, %18, %cst_20 {dimension_numbers = #tpu.dot_dimension_numbers<[1], [0], [0], [1], [0, 0, 1, 1], [], []>} : vector<24x28xf32>, vector<28x240xf32>, vector<24x240xf32> -> vector<24x240xf32>
    %20 = arith.addf %15, %19 : vector<24x240xf32>
    %21 = vector.extract_strided_slice %6 {offsets = [3, 0], sizes = [24, 28], strides = [1, 1]} : vector<28x28xf32> to vector<24x28xf32>
    %c3 = arith.constant 3 : index
    %c0_21 = arith.constant 0 : index
    %c0_22 = arith.constant 0 : index
    %22 = vector.load %arg2[%c3, %c0_21, %c0_22] : memref<5x28x240xf32, #tpu.memory_space<vmem>>, vector<1x28x240xf32>
    %23 = vector.shape_cast %22 : vector<1x28x240xf32> to vector<28x240xf32>
    %cst_23 = arith.constant dense<0.000000e+00> : vector<24x240xf32>
    %24 = tpu.matmul %21, %23, %cst_23 {dimension_numbers = #tpu.dot_dimension_numbers<[1], [0], [0], [1], [0, 0, 1, 1], [], []>} : vector<24x28xf32>, vector<28x240xf32>, vector<24x240xf32> -> vector<24x240xf32>
    %25 = arith.addf %20, %24 : vector<24x240xf32>
    %26 = vector.extract_strided_slice %6 {offsets = [4, 0], sizes = [24, 28], strides = [1, 1]} : vector<28x28xf32> to vector<24x28xf32>
    %c4 = arith.constant 4 : index
    %c0_24 = arith.constant 0 : index
    %c0_25 = arith.constant 0 : index
    %27 = vector.load %arg2[%c4, %c0_24, %c0_25] : memref<5x28x240xf32, #tpu.memory_space<vmem>>, vector<1x28x240xf32>
    %28 = vector.shape_cast %27 : vector<1x28x240xf32> to vector<28x240xf32>
    %cst_26 = arith.constant dense<0.000000e+00> : vector<24x240xf32>
    %29 = tpu.matmul %26, %28, %cst_26 {dimension_numbers = #tpu.dot_dimension_numbers<[1], [0], [0], [1], [0, 0, 1, 1], [], []>} : vector<24x28xf32>, vector<28x240xf32>, vector<24x240xf32> -> vector<24x240xf32>
    %30 = arith.addf %25, %29 : vector<24x240xf32>
    %31 = vector.extract_strided_slice %30 {offsets = [0, 0], sizes = [24, 230], strides = [1, 1]} : vector<24x240xf32> to vector<24x230xf32>
    %32 = vector.extract_strided_slice %30 {offsets = [0, 10], sizes = [24, 230], strides = [1, 1]} : vector<24x240xf32> to vector<24x230xf32>
    %33 = arith.maximumf %31, %32 : vector<24x230xf32>
    %34 = vector.extract_strided_slice %33 {offsets = [0, 0], sizes = [23, 230], strides = [1, 1]} : vector<24x230xf32> to vector<23x230xf32>
    %35 = vector.extract_strided_slice %33 {offsets = [1, 0], sizes = [23, 230], strides = [1, 1]} : vector<24x230xf32> to vector<23x230xf32>
    %36 = arith.maximumf %34, %35 : vector<23x230xf32>
    %37 = vector.broadcast %0 : vector<1x230xf32> to vector<23x230xf32>
    %38 = arith.addf %36, %37 : vector<23x230xf32>
    %cst_27 = arith.constant 0.000000e+00 : f32
    %39 = vector.broadcast %cst_27 : f32 to vector<23x230xf32>
    %40 = arith.maximumf %38, %39 : vector<23x230xf32>
    %cst_28 = arith.constant dense<0.000000e+00> : vector<12x230xf32>
    %41 = tpu.matmul %2, %40, %cst_28 {dimension_numbers = #tpu.dot_dimension_numbers<[1], [0], [0], [1], [0, 0, 1, 1], [], []>} : vector<12x23xf32>, vector<23x230xf32>, vector<12x230xf32> -> vector<12x230xf32>
    %42 = vector.extract_strided_slice %41 {offsets = [0, 0], sizes = [8, 230], strides = [1, 1]} : vector<12x230xf32> to vector<8x230xf32>
    %c0_29 = arith.constant 0 : index
    %c0_30 = arith.constant 0 : index
    %c0_31 = arith.constant 0 : index
    %43 = vector.load %arg4[%c0_29, %c0_30, %c0_31] : memref<5x230x160xf32, #tpu.memory_space<vmem>>, vector<1x230x160xf32>
    %44 = vector.shape_cast %43 : vector<1x230x160xf32> to vector<230x160xf32>
    %cst_32 = arith.constant dense<0.000000e+00> : vector<8x160xf32>
    %45 = tpu.matmul %42, %44, %cst_32 {dimension_numbers = #tpu.dot_dimension_numbers<[1], [0], [0], [1], [0, 0, 1, 1], [], []>} : vector<8x230xf32>, vector<230x160xf32>, vector<8x160xf32> -> vector<8x160xf32>
    %46 = vector.extract_strided_slice %41 {offsets = [1, 0], sizes = [8, 230], strides = [1, 1]} : vector<12x230xf32> to vector<8x230xf32>
    %c1_33 = arith.constant 1 : index
    %c0_34 = arith.constant 0 : index
    %c0_35 = arith.constant 0 : index
    %47 = vector.load %arg4[%c1_33, %c0_34, %c0_35] : memref<5x230x160xf32, #tpu.memory_space<vmem>>, vector<1x230x160xf32>
    %48 = vector.shape_cast %47 : vector<1x230x160xf32> to vector<230x160xf32>
    %cst_36 = arith.constant dense<0.000000e+00> : vector<8x160xf32>
    %49 = tpu.matmul %46, %48, %cst_36 {dimension_numbers = #tpu.dot_dimension_numbers<[1], [0], [0], [1], [0, 0, 1, 1], [], []>} : vector<8x230xf32>, vector<230x160xf32>, vector<8x160xf32> -> vector<8x160xf32>
    %50 = arith.addf %45, %49 : vector<8x160xf32>
    %51 = vector.extract_strided_slice %41 {offsets = [2, 0], sizes = [8, 230], strides = [1, 1]} : vector<12x230xf32> to vector<8x230xf32>
    %c2_37 = arith.constant 2 : index
    %c0_38 = arith.constant 0 : index
    %c0_39 = arith.constant 0 : index
    %52 = vector.load %arg4[%c2_37, %c0_38, %c0_39] : memref<5x230x160xf32, #tpu.memory_space<vmem>>, vector<1x230x160xf32>
    %53 = vector.shape_cast %52 : vector<1x230x160xf32> to vector<230x160xf32>
    %cst_40 = arith.constant dense<0.000000e+00> : vector<8x160xf32>
    %54 = tpu.matmul %51, %53, %cst_40 {dimension_numbers = #tpu.dot_dimension_numbers<[1], [0], [0], [1], [0, 0, 1, 1], [], []>} : vector<8x230xf32>, vector<230x160xf32>, vector<8x160xf32> -> vector<8x160xf32>
    %55 = arith.addf %50, %54 : vector<8x160xf32>
    %56 = vector.extract_strided_slice %41 {offsets = [3, 0], sizes = [8, 230], strides = [1, 1]} : vector<12x230xf32> to vector<8x230xf32>
    %c3_41 = arith.constant 3 : index
    %c0_42 = arith.constant 0 : index
    %c0_43 = arith.constant 0 : index
    %57 = vector.load %arg4[%c3_41, %c0_42, %c0_43] : memref<5x230x160xf32, #tpu.memory_space<vmem>>, vector<1x230x160xf32>
    %58 = vector.shape_cast %57 : vector<1x230x160xf32> to vector<230x160xf32>
    %cst_44 = arith.constant dense<0.000000e+00> : vector<8x160xf32>
    %59 = tpu.matmul %56, %58, %cst_44 {dimension_numbers = #tpu.dot_dimension_numbers<[1], [0], [0], [1], [0, 0, 1, 1], [], []>} : vector<8x230xf32>, vector<230x160xf32>, vector<8x160xf32> -> vector<8x160xf32>
    %60 = arith.addf %55, %59 : vector<8x160xf32>
    %61 = vector.extract_strided_slice %41 {offsets = [4, 0], sizes = [8, 230], strides = [1, 1]} : vector<12x230xf32> to vector<8x230xf32>
    %c4_45 = arith.constant 4 : index
    %c0_46 = arith.constant 0 : index
    %c0_47 = arith.constant 0 : index
    %62 = vector.load %arg4[%c4_45, %c0_46, %c0_47] : memref<5x230x160xf32, #tpu.memory_space<vmem>>, vector<1x230x160xf32>
    %63 = vector.shape_cast %62 : vector<1x230x160xf32> to vector<230x160xf32>
    %cst_48 = arith.constant dense<0.000000e+00> : vector<8x160xf32>
    %64 = tpu.matmul %61, %63, %cst_48 {dimension_numbers = #tpu.dot_dimension_numbers<[1], [0], [0], [1], [0, 0, 1, 1], [], []>} : vector<8x230xf32>, vector<230x160xf32>, vector<8x160xf32> -> vector<8x160xf32>
    %65 = arith.addf %60, %64 : vector<8x160xf32>
    %66 = vector.extract_strided_slice %65 {offsets = [0, 0], sizes = [8, 140], strides = [1, 1]} : vector<8x160xf32> to vector<8x140xf32>
    %67 = vector.extract_strided_slice %65 {offsets = [0, 20], sizes = [8, 140], strides = [1, 1]} : vector<8x160xf32> to vector<8x140xf32>
    %68 = arith.maximumf %66, %67 : vector<8x140xf32>
    %69 = vector.extract_strided_slice %68 {offsets = [0, 0], sizes = [7, 140], strides = [1, 1]} : vector<8x140xf32> to vector<7x140xf32>
    %70 = vector.extract_strided_slice %68 {offsets = [1, 0], sizes = [7, 140], strides = [1, 1]} : vector<8x140xf32> to vector<7x140xf32>
    %71 = arith.maximumf %69, %70 : vector<7x140xf32>
    %72 = vector.broadcast %1 : vector<1x140xf32> to vector<7x140xf32>
    %73 = arith.addf %71, %72 : vector<7x140xf32>
    %cst_49 = arith.constant 0.000000e+00 : f32
    %74 = vector.broadcast %cst_49 : f32 to vector<7x140xf32>
    %75 = arith.maximumf %73, %74 : vector<7x140xf32>
    %cst_50 = arith.constant dense<0.000000e+00> : vector<4x140xf32>
    %76 = tpu.matmul %3, %75, %cst_50 {dimension_numbers = #tpu.dot_dimension_numbers<[1], [0], [0], [1], [0, 0, 1, 1], [], []>} : vector<4x7xf32>, vector<7x140xf32>, vector<4x140xf32> -> vector<4x140xf32>
    %cst_51 = arith.constant dense<0.000000e+00> : vector<4x80xf32>
    %77 = tpu.matmul %76, %4, %cst_51 {dimension_numbers = #tpu.dot_dimension_numbers<[1], [0], [0], [1], [0, 0, 1, 1], [], []>} : vector<4x140xf32>, vector<140x80xf32>, vector<4x80xf32> -> vector<4x80xf32>
    %c0_52 = arith.constant 0 : index
    %c0_53 = arith.constant 0 : index
    %c0_54 = arith.constant 0 : index
    %78 = vector.load %arg9[%c0_52, %c0_53, %c0_54] : memref<1x4x80xf32, #tpu.memory_space<vmem>>, vector<1x4x80xf32>
    %79 = vector.shape_cast %78 : vector<1x4x80xf32> to vector<4x80xf32>
    %80 = vector.shape_cast %77 : vector<4x80xf32> to vector<1x4x80xf32>
    tpu.vector_store %arg9[%c0_52, %c0_53, %c0_54], %80 {strides = array<i32>} : memref<1x4x80xf32, #tpu.memory_space<vmem>>, vector<1x4x80xf32>,
    return
  }
  func.func @transform_0(%arg0: i32) -> (i32, i32, i32) {
    %c0_i32 = arith.constant 0 : i32
    %c0_i32_0 = arith.constant 0 : i32
    %c0_i32_1 = arith.constant 0 : i32
    return %arg0, %c0_i32, %c0_i32_0 : i32, i32, i32
  }
  func.func @transform_1(%arg0: i32) -> (i32, i32, i32) {
    %c0_i32 = arith.constant 0 : i32
    %c0_i32_0 = arith.constant 0 : i32
    %c0_i32_1 = arith.constant 0 : i32
    %c0_i32_2 = arith.constant 0 : i32
    return %c0_i32, %c0_i32_0, %c0_i32_1 : i32, i32, i32
  }
  func.func @transform_2(%arg0: i32) -> (i32, i32) {
    %c0_i32 = arith.constant 0 : i32
    %c0_i32_0 = arith.constant 0 : i32
    %c0_i32_1 = arith.constant 0 : i32
    return %c0_i32, %c0_i32_0 : i32, i32
  }
  func.func @transform_3(%arg0: i32) -> (i32, i32, i32) {
    %c0_i32 = arith.constant 0 : i32
    %c0_i32_0 = arith.constant 0 : i32
    %c0_i32_1 = arith.constant 0 : i32
    %c0_i32_2 = arith.constant 0 : i32
    return %c0_i32, %c0_i32_0, %c0_i32_1 : i32, i32, i32
  }
  func.func @transform_4(%arg0: i32) -> (i32, i32) {
    %c0_i32 = arith.constant 0 : i32
    %c0_i32_0 = arith.constant 0 : i32
    %c0_i32_1 = arith.constant 0 : i32
    return %c0_i32, %c0_i32_0 : i32, i32
  }
  func.func @transform_5(%arg0: i32) -> (i32, i32) {
    %c0_i32 = arith.constant 0 : i32
    %c0_i32_0 = arith.constant 0 : i32
    %c0_i32_1 = arith.constant 0 : i32
    return %c0_i32, %c0_i32_0 : i32, i32
  }
  func.func @transform_6(%arg0: i32) -> (i32, i32) {
    %c0_i32 = arith.constant 0 : i32
    %c0_i32_0 = arith.constant 0 : i32
    %c0_i32_1 = arith.constant 0 : i32
    return %c0_i32, %c0_i32_0 : i32, i32
  }
  func.func @transform_7(%arg0: i32) -> (i32, i32) {
    %c0_i32 = arith.constant 0 : i32
    %c0_i32_0 = arith.constant 0 : i32
    %c0_i32_1 = arith.constant 0 : i32
    return %c0_i32, %c0_i32_0 : i32, i32
  }
  func.func @transform_8(%arg0: i32) -> (i32, i32, i32) {
    %c0_i32 = arith.constant 0 : i32
    %c0_i32_0 = arith.constant 0 : i32
    %c0_i32_1 = arith.constant 0 : i32
    return %arg0, %c0_i32, %c0_i32_0 : i32, i32, i32
  }
}

</mosaic_0001>

<llo_original>
// kernel: tile.13
$region0: #{tile.13}
  #allocation0 [shape = 's32[1]{0}', space=sflag, size = 0x4, scoped, tag = 'scoped memory for tile.13']
  %s0 = inlined_call_operand.vmem [shape: f32[10], index: 0, kind: input, shape index: {}]
  %s1 = inlined_call_operand.vmem [shape: f32[23,10], index: 1, kind: output, shape index: {}]
  // Predicated region
  $region2: #{tile.13} parent=0 // pred_check
    _
  $region3: #{tile.13} parent=0 // pred_check_branch
    %3 = sbr.rel (0) target = $region5
  $region4: #{tile.13} parent=0 // pred_region
    _
  $region5: #{tile.13} parent=0 // pred_fallthru
    _
  %v4 = vld [vmem:[%s0] ss:$0 sm:$0xff]
  %5 = vst [vmem:[%s1] sm:$0xff] %v4
  %s6 = scalar_lea.vmem %s1, 8
  %7 = vst [vmem:[%s6] sm:$0xff] %v4
  %s8 = scalar_lea.vmem %s1, 16
  %9 = vst [vmem:[%s8] sm:$0xff] %v4

// kernel: tile.14
$region0: #{tile.14}
  %s0 = inlined_call_operand.vmem [shape: f32[23,10], index: 0, kind: input, shape index: {}]
  %s1 = inlined_call_operand.vmem [shape: f32[1,230], index: 1, kind: output, shape index: {}]
  $region1: #{tile.14} parent=0
    #allocation0 [shape = 'u8[8192]{0}', space=vmem, size = 0x2000, scoped, tag = 'scoped mem for output reshape']
    %v2 = vld [vmem:[%s0] sm:$0x1]
    %vm3 = vcmask 80896
    %4 = vst.msk [vmem:[#allocation0] sm:$0x1] %vm3, %v2
    %s5 = scalar_lea.vmem %s0, 12
    %v6 = vld [vmem:[%s5] sm:$0x1]
    %s7 = scalar_lea.vmem %s0, 12
    %v8 = vld [vmem:[%s7] sm:$0x1]
    %vm9 = vcmask 64512
    %v10 = vsel %vm9, %v8, %v6
    %11 = vrot.lane.b32.xlu0 %v10, 120
    %v12 = vpop.permute.xlu0 %11
    %vm13 = vcmask 15360
    %s14 = scalar_lea.vmem [#allocation0], 8
    %15 = vst.msk [vmem:[%s14] sm:$0x1] %vm13, %v12
    %vm16 = vcmask 1048512
    %17 = vst.msk [vmem:[#allocation0] sm:$0x1] %vm16, %v12
    %s18 = scalar_lea.vmem %s0, 11
    %v19 = vld [vmem:[%s18] sm:$0x1]
    %20 = vrot.lane.b32.xlu0 %v19, 110
    %v21 = vpop.permute.xlu0 %20
    %vm22 = vcmask 982896
    %23 = vst.msk [vmem:[#allocation0] sm:$0x1] %vm22, %v21
    %s24 = scalar_lea.vmem %s0, 10
    %v25 = vld [vmem:[%s24] sm:$0x1]
    %26 = vrot.lane.b32.xlu0 %v25, 100
    %v27 = vpop.permute.xlu0 %26
    %vm28 = vcmask 900896
    %29 = vst.msk [vmem:[#allocation0] sm:$0x1] %vm28, %v27
    %s30 = scalar_lea.vmem %s0, 22
    %v31 = vld [vmem:[%s30] sm:$0x1]
    %32 = vrot.lane.b32.xlu0 %v31, 92
    %v33 = vpop.permute.xlu0 %32
    %vm34 = vcmask 835296
    %s35 = scalar_lea.vmem [#allocation0], 8
    %36 = vst.msk [vmem:[%s35] sm:$0x1] %vm34, %v33
    %s37 = scalar_lea.vmem %s0, 9
    %v38 = vld [vmem:[%s37] sm:$0x1]
    %39 = vrot.lane.b32.xlu0 %v38, 90
    %v40 = vpop.permute.xlu0 %39
    %vm41 = vcmask 818896
    %42 = vst.msk [vmem:[#allocation0] sm:$0x1] %vm41, %v40
    %s43 = scalar_lea.vmem %s0, 21
    %v44 = vld [vmem:[%s43] sm:$0x1]
    %45 = vrot.lane.b32.xlu0 %v44, 82
    %v46 = vpop.permute.xlu0 %45
    %vm47 = vcmask 753296
    %s48 = scalar_lea.vmem [#allocation0], 8
    %49 = vst.msk [vmem:[%s48] sm:$0x1] %vm47, %v46
    %s50 = scalar_lea.vmem %s0, 8
    %v51 = vld [vmem:[%s50] sm:$0x1]
    %52 = vrot.lane.b32.xlu0 %v51, 80
    %v53 = vpop.permute.xlu0 %52
    %vm54 = vcmask 736896
    %55 = vst.msk [vmem:[#allocation0] sm:$0x1] %vm54, %v53
    %s56 = scalar_lea.vmem %s0, 20
    %v57 = vld [vmem:[%s56] sm:$0x1]
    %58 = vrot.lane.b32.xlu0 %v57, 72
    %v59 = vpop.permute.xlu0 %58
    %vm60 = vcmask 671296
    %s61 = scalar_lea.vmem [#allocation0], 8
    %62 = vst.msk [vmem:[%s61] sm:$0x1] %vm60, %v59
    %s63 = scalar_lea.vmem %s0, 7
    %v64 = vld [vmem:[%s63] sm:$0x1]
    %65 = vrot.lane.b32.xlu0 %v64, 70
    %v66 = vpop.permute.xlu0 %65
    %vm67 = vcmask 654896
    %68 = vst.msk [vmem:[#allocation0] sm:$0x1] %vm67, %v66
    %s69 = scalar_lea.vmem %s0, 19
    %v70 = vld [vmem:[%s69] sm:$0x1]
    %71 = vrot.lane.b32.xlu0 %v70, 62
    %v72 = vpop.permute.xlu0 %71
    %vm73 = vcmask 589296
    %s74 = scalar_lea.vmem [#allocation0], 8
    %75 = vst.msk [vmem:[%s74] sm:$0x1] %vm73, %v72
    %s76 = scalar_lea.vmem %s0, 6
    %v77 = vld [vmem:[%s76] sm:$0x1]
    %78 = vrot.lane.b32.xlu0 %v77, 60
    %v79 = vpop.permute.xlu0 %78
    %vm80 = vcmask 572896
    %81 = vst.msk [vmem:[#allocation0] sm:$0x1] %vm80, %v79
    %s82 = scalar_lea.vmem %s0, 18
    %v83 = vld [vmem:[%s82] sm:$0x1]
    %84 = vrot.lane.b32.xlu0 %v83, 52
    %v85 = vpop.permute.xlu0 %84
    %vm86 = vcmask 507296
    %s87 = scalar_lea.vmem [#allocation0], 8
    %88 = vst.msk [vmem:[%s87] sm:$0x1] %vm86, %v85
    %s89 = scalar_lea.vmem %s0, 5
    %v90 = vld [vmem:[%s89] sm:$0x1]
    %91 = vrot.lane.b32.xlu0 %v90, 50
    %v92 = vpop.permute.xlu0 %91
    %vm93 = vcmask 490896
    %94 = vst.msk [vmem:[#allocation0] sm:$0x1] %vm93, %v92
    %s95 = scalar_lea.vmem %s0, 17
    %v96 = vld [vmem:[%s95] sm:$0x1]
    %97 = vrot.lane.b32.xlu0 %v96, 42
    %v98 = vpop.permute.xlu0 %97
    %vm99 = vcmask 425296
    %s100 = scalar_lea.vmem [#allocation0], 8
    %101 = vst.msk [vmem:[%s100] sm:$0x1] %vm99, %v98
    %s102 = scalar_lea.vmem %s0, 4
    %v103 = vld [vmem:[%s102] sm:$0x1]
    %104 = vrot.lane.b32.xlu0 %v103, 40
    %v105 = vpop.permute.xlu0 %104
    %vm106 = vcmask 408896
    %107 = vst.msk [vmem:[#allocation0] sm:$0x1] %vm106, %v105
    %s108 = scalar_lea.vmem %s0, 16
    %v109 = vld [vmem:[%s108] sm:$0x1]
    %110 = vrot.lane.b32.xlu0 %v109, 32
    %v111 = vpop.permute.xlu0 %110
    %vm112 = vcmask 343296
    %s113 = scalar_lea.vmem [#allocation0], 8
    %114 = vst.msk [vmem:[%s113] sm:$0x1] %vm112, %v111
    %s115 = scalar_lea.vmem %s0, 3
    %v116 = vld [vmem:[%s115] sm:$0x1]
    %117 = vrot.lane.b32.xlu0 %v116, 30
    %v118 = vpop.permute.xlu0 %117
    %vm119 = vcmask 326896
    %120 = vst.msk [vmem:[#allocation0] sm:$0x1] %vm119, %v118
    %s121 = scalar_lea.vmem %s0, 15
    %v122 = vld [vmem:[%s121] sm:$0x1]
    %123 = vrot.lane.b32.xlu0 %v122, 22
    %v124 = vpop.permute.xlu0 %123
    %vm125 = vcmask 261296
    %s126 = scalar_lea.vmem [#allocation0], 8
    %127 = vst.msk [vmem:[%s126] sm:$0x1] %vm125, %v124
    %s128 = scalar_lea.vmem %s0, 2
    %v129 = vld [vmem:[%s128] sm:$0x1]
    %130 = vrot.lane.b32.xlu0 %v129, 20
    %v131 = vpop.permute.xlu0 %130
    %vm132 = vcmask 244896
    %133 = vst.msk [vmem:[#allocation0] sm:$0x1] %vm132, %v131
    %s134 = scalar_lea.vmem %s0, 14
    %v135 = vld [vmem:[%s134] sm:$0x1]
    %136 = vrot.lane.b32.xlu0 %v135, 12
    %v137 = vpop.permute.xlu0 %136
    %vm138 = vcmask 179296
    %s139 = scalar_lea.vmem [#allocation0], 8
    %140 = vst.msk [vmem:[%s139] sm:$0x1] %vm138, %v137
    %s141 = scalar_lea.vmem %s0, 1
    %v142 = vld [vmem:[%s141] sm:$0x1]
    %143 = vrot.lane.b32.xlu0 %v142, 10
    %v144 = vpop.permute.xlu0 %143
    %vm145 = vcmask 162896
    %146 = vst.msk [vmem:[#allocation0] sm:$0x1] %vm145, %v144
    %s147 = scalar_lea.vmem %s0, 13
    %v148 = vld [vmem:[%s147] sm:$0x1]
    %149 = vrot.lane.b32.xlu0 %v148, 2
    %v150 = vpop.permute.xlu0 %149
    %vm151 = vcmask 97296
    %s152 = scalar_lea.vmem [#allocation0], 8
    %153 = vst.msk [vmem:[%s152] sm:$0x1] %vm151, %v150
    %s155 = ssub.s32 2, 1
    %v156 = vld [vmem:[#allocation0] sm:%s155]
    %s158 = ssub.s32 2, 1
    %159 = vst [vmem:[%s1] sm:%s158] %v156
    %s160 = scalar_lea.vmem [#allocation0], 8
    %v161 = vld [vmem:[%s160] sm:%s155]
    %s163 = ssub.s32 2, 1
    %s164 = scalar_lea.vmem %s1, 1
    %165 = vst [vmem:[%s164] sm:%s163] %v161

// kernel: tile.18
$region0: #{tile.18}
  #allocation0 [shape = 's32[1]{0}', space=sflag, size = 0x4, scoped, tag = 'scoped memory for tile.18']
  %s0 = inlined_call_operand.vmem [shape: f32[20], index: 0, kind: input, shape index: {}]
  %s1 = inlined_call_operand.vmem [shape: f32[7,20], index: 1, kind: output, shape index: {}]
  // Predicated region
  $region2: #{tile.18} parent=0 // pred_check
    _
  $region3: #{tile.18} parent=0 // pred_check_branch
    %3 = sbr.rel (0) target = $region5
  $region4: #{tile.18} parent=0 // pred_region
    _
  $region5: #{tile.18} parent=0 // pred_fallthru
    _
  %v4 = vld [vmem:[%s0] ss:$0 sm:$0xff]
  %5 = vst [vmem:[%s1] sm:$0xff] %v4

// kernel: tile.19
$region0: #{tile.19}
  %s0 = inlined_call_operand.vmem [shape: f32[7,20], index: 0, kind: input, shape index: {}]
  %s1 = inlined_call_operand.vmem [shape: f32[1,140], index: 1, kind: output, shape index: {}]
  $region1: #{tile.19} parent=0
    #allocation0 [shape = 'u8[8192]{0}', space=vmem, size = 0x2000, scoped, tag = 'scoped mem for output reshape']
    %v2 = vld [vmem:[%s0] sm:$0x1]
    %vm3 = vcmask 162816
    %4 = vst.msk [vmem:[#allocation0] sm:$0x1] %vm3, %v2
    %s5 = scalar_lea.vmem %s0, 6
    %v6 = vld [vmem:[%s5] sm:$0x1]
    %s7 = scalar_lea.vmem %s0, 6
    %v8 = vld [vmem:[%s7] sm:$0x1]
    %vm9 = vcmask 64512
    %v10 = vsel %vm9, %v8, %v6
    %11 = vrot.lane.b32.xlu0 %v10, 120
    %v12 = vpop.permute.xlu0 %11
    %vm13 = vcmask 97280
    %s14 = scalar_lea.vmem [#allocation0], 8
    %15 = vst.msk [vmem:[%s14] sm:$0x1] %vm13, %v12
    %vm16 = vcmask 1048512
    %17 = vst.msk [vmem:[#allocation0] sm:$0x1] %vm16, %v12
    %s18 = scalar_lea.vmem %s0, 5
    %v19 = vld [vmem:[%s18] sm:$0x1]
    %20 = vrot.lane.b32.xlu0 %v19, 100
    %v21 = vpop.permute.xlu0 %20
    %vm22 = vcmask 982816
    %23 = vst.msk [vmem:[#allocation0] sm:$0x1] %vm22, %v21
    %s24 = scalar_lea.vmem %s0, 4
    %v25 = vld [vmem:[%s24] sm:$0x1]
    %26 = vrot.lane.b32.xlu0 %v25, 80
    %v27 = vpop.permute.xlu0 %26
    %vm28 = vcmask 818816
    %29 = vst.msk [vmem:[#allocation0] sm:$0x1] %vm28, %v27
    %s30 = scalar_lea.vmem %s0, 3
    %v31 = vld [vmem:[%s30] sm:$0x1]
    %32 = vrot.lane.b32.xlu0 %v31, 60
    %v33 = vpop.permute.xlu0 %32
    %vm34 = vcmask 654816
    %35 = vst.msk [vmem:[#allocation0] sm:$0x1] %vm34, %v33
    %s36 = scalar_lea.vmem %s0, 2
    %v37 = vld [vmem:[%s36] sm:$0x1]
    %38 = vrot.lane.b32.xlu0 %v37, 40
    %v39 = vpop.permute.xlu0 %38
    %vm40 = vcmask 490816
    %41 = vst.msk [vmem:[#allocation0] sm:$0x1] %vm40, %v39
    %s42 = scalar_lea.vmem %s0, 1
    %v43 = vld [vmem:[%s42] sm:$0x1]
    %44 = vrot.lane.b32.xlu0 %v43, 20
    %v45 = vpop.permute.xlu0 %44
    %vm46 = vcmask 326816
    %47 = vst.msk [vmem:[#allocation0] sm:$0x1] %vm46, %v45
    %s49 = ssub.s32 2, 1
    %v50 = vld [vmem:[#allocation0] sm:%s49]
    %s52 = ssub.s32 2, 1
    %53 = vst [vmem:[%s1] sm:%s52] %v50
    %s54 = scalar_lea.vmem [#allocation0], 8
    %v55 = vld [vmem:[%s54] sm:%s49]
    %s57 = ssub.s32 2, 1
    %s58 = scalar_lea.vmem %s1, 1
    %59 = vst [vmem:[%s58] sm:%s57] %v55

// kernel: fed_contrastive_forward.1
$region0: #{fed_contrastive_forward.1}
  #allocation0 [shape = 'u32[]', space=smem, size = 0x4, offset = 0x4, fixed_abs, tag = 'smem constant byte address 0x4 - core index']
  #allocation1 [shape = 'u32[72,128]{1,0:T(1,128)}', space=vmem, size = 0x9000, scoped, tag = 'internal scratch']
  %s0 = inlined_call_operand.vmem [shape: f32[2,28,28], index: 0, kind: input, shape index: {}]
  %s1 = inlined_call_operand.vmem [shape: f32[5,28,240], index: 1, kind: input, shape index: {}]
  %s2 = inlined_call_operand.vmem [shape: f32[1,230], index: 2, kind: input, shape index: {}]
  %s3 = inlined_call_operand.vmem [shape: f32[5,230,160], index: 3, kind: input, shape index: {}]
  %s4 = inlined_call_operand.vmem [shape: f32[1,140], index: 4, kind: input, shape index: {}]
  %s5 = inlined_call_operand.vmem [shape: f32[12,23], index: 5, kind: input, shape index: {}]
  %s6 = inlined_call_operand.vmem [shape: f32[4,7], index: 6, kind: input, shape index: {}]
  %s7 = inlined_call_operand.vmem [shape: f32[140,80], index: 7, kind: input, shape index: {}]
  %s8 = inlined_call_operand.vmem [shape: f32[2,4,80], index: 8, kind: output, shape index: {}]
  %s9 = sld [smem:[#allocation0]]
  $region65: #{fed_contrastive_forward.1} parent=0
    _
  %s11 = ssub.s32 1, %s9
  %s12 = scalar_select 0, %s11, %s9
  loop: start=0, step=1, limit=4
  $region2: #{fed_contrastive_forward.1} parent=0 // loop_pre_header
    _
  $region3: #{fed_contrastive_forward.1} parent=0 // loop_header
    %s14 = sphi 0, %s18
    %p15 = scmp.ge.s32.totalorder %s14, 4
    %s24 = sphi 0, %s26
    %s27 = sphi 0, %s24
    %s28 = sphi 0, %s27
    %s44 = sphi 0, %s28
    %s48 = sphi 0, %s48
    %s50 = sphi 0, %s48
    %s51 = sphi 0, %s50
    %s65 = sphi 0, %s51
    %s69 = sphi 0, %s69
    %s71 = sphi 0, %s69
    %s72 = sphi 0, %s71
    %s86 = sphi 0, %s72
    %s90 = sphi 0, %s90
    %s92 = sphi 0, %s90
    %s93 = sphi 0, %s92
    %s107 = sphi 0, %s93
    %s111 = sphi 0, %s111
    %s113 = sphi 0, %s111
    %s114 = sphi 0, %s113
    %s128 = sphi 0, %s114
    %s132 = sphi 0, %s132
    %s134 = sphi 0, %s132
    %s135 = sphi 0, %s134
    %s149 = sphi 0, %s135
    %s153 = sphi 0, %s153
    %s155 = sphi 0, %s153
    %s156 = sphi 0, %s155
    %s170 = sphi 0, %s156
    %s174 = sphi 0, %s174
    %s176 = sphi 0, %s174
    %s177 = sphi 0, %s176
    %s191 = sphi 0, %s177
    %s197 = sphi 0, %s199
    %s200 = sphi 0, %s197
    %s201 = sphi 0, %s200
    %s217 = sphi 0, %s201
  $region4: #{fed_contrastive_forward.1} parent=0 // loop_header_branch
    %17 = sbr.rel (%p15) target = $region8
  $region5: #{fed_contrastive_forward.1} parent=0 // loop_body
    %s19 = ssub.s32 %s14, 1
    %s20 = ssub.s32 %s14, 2
    %s21 = sadd.s32 %s14, 1
    %s22 = ssub.s32 %s14, %s21
    %p23 = scmp.eq.s32.totalorder %s22, 0
    %s25 = sadd.s32 %s24, 1
    %s26 = scalar_select %p23, %s24, %s25
    %p29 = pneg %p23
    %p30 = scmp.eq.s32.totalorder %s14, 1
    %p31 = por %p29, %p30
    %p32 = scmp.ne.s32.totalorder %s24, %s27
    %p33 = scmp.eq.s32.totalorder %s14, 0
    %p34 = por %p32, %p33
    %p35 = scmp.ne.s32.totalorder %s24, %s27
    %p36 = scmp.eq.s32.totalorder %s19, 1
    %p37 = por %p35, %p36
    %p38 = scmp.ne.s32.totalorder %s27, %s28
    %p39 = scmp.eq.s32.totalorder %s19, 0
    %p40 = por %p38, %p39
    %p41 = scmp.ne.s32.totalorder %s27, %s28
    %p42 = scmp.eq.s32.totalorder %s20, 1
    %p43 = por %p41, %p42
    %p45 = scmp.ne.s32.totalorder %s28, %s44
    %p46 = scmp.eq.s32.totalorder %s20, 0
    %p47 = por %p45, %p46
    %s49 = sadd.s32 %s48, 1
    %p52 = scmp.eq.s32.totalorder %s14, 1
    %p53 = scmp.ne.s32.totalorder %s48, %s50
    %p54 = scmp.eq.s32.totalorder %s14, 0
    %p55 = por %p53, %p54
    %p56 = scmp.ne.s32.totalorder %s48, %s50
    %p57 = scmp.eq.s32.totalorder %s19, 1
    %p58 = por %p56, %p57
    %p59 = scmp.ne.s32.totalorder %s50, %s51
    %p60 = scmp.eq.s32.totalorder %s19, 0
    %p61 = por %p59, %p60
    %p62 = scmp.ne.s32.totalorder %s50, %s51
    %p63 = scmp.eq.s32.totalorder %s20, 1
    %p64 = por %p62, %p63
    %p66 = scmp.ne.s32.totalorder %s51, %s65
    %p67 = scmp.eq.s32.totalorder %s20, 0
    %p68 = por %p66, %p67
    %s70 = sadd.s32 %s69, 1
    %p73 = scmp.eq.s32.totalorder %s14, 1
    %p74 = scmp.ne.s32.totalorder %s69, %s71
    %p75 = scmp.eq.s32.totalorder %s14, 0
    %p76 = por %p74, %p75
    %p77 = scmp.ne.s32.totalorder %s69, %s71
    %p78 = scmp.eq.s32.totalorder %s19, 1
    %p79 = por %p77, %p78
    %p80 = scmp.ne.s32.totalorder %s71, %s72
    %p81 = scmp.eq.s32.totalorder %s19, 0
    %p82 = por %p80, %p81
    %p83 = scmp.ne.s32.totalorder %s71, %s72
    %p84 = scmp.eq.s32.totalorder %s20, 1
    %p85 = por %p83, %p84
    %p87 = scmp.ne.s32.totalorder %s72, %s86
    %p88 = scmp.eq.s32.totalorder %s20, 0
    %p89 = por %p87, %p88
    %s91 = sadd.s32 %s90, 1
    %p94 = scmp.eq.s32.totalorder %s14, 1
    %p95 = scmp.ne.s32.totalorder %s90, %s92
    %p96 = scmp.eq.s32.totalorder %s14, 0
    %p97 = por %p95, %p96
    %p98 = scmp.ne.s32.totalorder %s90, %s92
    %p99 = scmp.eq.s32.totalorder %s19, 1
    %p100 = por %p98, %p99
    %p101 = scmp.ne.s32.totalorder %s92, %s93
    %p102 = scmp.eq.s32.totalorder %s19, 0
    %p103 = por %p101, %p102
    %p104 = scmp.ne.s32.totalorder %s92, %s93
    %p105 = scmp.eq.s32.totalorder %s20, 1
    %p106 = por %p104, %p105
    %p108 = scmp.ne.s32.totalorder %s93, %s107
    %p109 = scmp.eq.s32.totalorder %s20, 0
    %p110 = por %p108, %p109
    %s112 = sadd.s32 %s111, 1
    %p115 = scmp.eq.s32.totalorder %s14, 1
    %p116 = scmp.ne.s32.totalorder %s111, %s113
    %p117 = scmp.eq.s32.totalorder %s14, 0
    %p118 = por %p116, %p117
    %p119 = scmp.ne.s32.totalorder %s111, %s113
    %p120 = scmp.eq.s32.totalorder %s19, 1
    %p121 = por %p119, %p120
    %p122 = scmp.ne.s32.totalorder %s113, %s114
    %p123 = scmp.eq.s32.totalorder %s19, 0
    %p124 = por %p122, %p123
    %p125 = scmp.ne.s32.totalorder %s113, %s114
    %p126 = scmp.eq.s32.totalorder %s20, 1
    %p127 = por %p125, %p126
    %p129 = scmp.ne.s32.totalorder %s114, %s128
    %p130 = scmp.eq.s32.totalorder %s20, 0
    %p131 = por %p129, %p130
    %s133 = sadd.s32 %s132, 1
    %p136 = scmp.eq.s32.totalorder %s14, 1
    %p137 = scmp.ne.s32.totalorder %s132, %s134
    %p138 = scmp.eq.s32.totalorder %s14, 0
    %p139 = por %p137, %p138
    %p140 = scmp.ne.s32.totalorder %s132, %s134
    %p141 = scmp.eq.s32.totalorder %s19, 1
    %p142 = por %p140, %p141
    %p143 = scmp.ne.s32.totalorder %s134, %s135
    %p144 = scmp.eq.s32.totalorder %s19, 0
    %p145 = por %p143, %p144
    %p146 = scmp.ne.s32.totalorder %s134, %s135
    %p147 = scmp.eq.s32.totalorder %s20, 1
    %p148 = por %p146, %p147
    %p150 = scmp.ne.s32.totalorder %s135, %s149
    %p151 = scmp.eq.s32.totalorder %s20, 0
    %p152 = por %p150, %p151
    %s154 = sadd.s32 %s153, 1
    %p157 = scmp.eq.s32.totalorder %s14, 1
    %p158 = scmp.ne.s32.totalorder %s153, %s155
    %p159 = scmp.eq.s32.totalorder %s14, 0
    %p160 = por %p158, %p159
    %p161 = scmp.ne.s32.totalorder %s153, %s155
    %p162 = scmp.eq.s32.totalorder %s19, 1
    %p163 = por %p161, %p162
    %p164 = scmp.ne.s32.totalorder %s155, %s156
    %p165 = scmp.eq.s32.totalorder %s19, 0
    %p166 = por %p164, %p165
    %p167 = scmp.ne.s32.totalorder %s155, %s156
    %p168 = scmp.eq.s32.totalorder %s20, 1
    %p169 = por %p167, %p168
    %p171 = scmp.ne.s32.totalorder %s156, %s170
    %p172 = scmp.eq.s32.totalorder %s20, 0
    %p173 = por %p171, %p172
    %s175 = sadd.s32 %s174, 1
    %p178 = scmp.eq.s32.totalorder %s14, 1
    %p179 = scmp.ne.s32.totalorder %s174, %s176
    %p180 = scmp.eq.s32.totalorder %s14, 0
    %p181 = por %p179, %p180
    %p182 = scmp.ne.s32.totalorder %s174, %s176
    %p183 = scmp.eq.s32.totalorder %s19, 1
    %p184 = por %p182, %p183
    %p185 = scmp.ne.s32.totalorder %s176, %s177
    %p186 = scmp.eq.s32.totalorder %s19, 0
    %p187 = por %p185, %p186
    %p188 = scmp.ne.s32.totalorder %s176, %s177
    %p189 = scmp.eq.s32.totalorder %s20, 1
    %p190 = por %p188, %p189
    %p192 = scmp.ne.s32.totalorder %s177, %s191
    %p193 = scmp.eq.s32.totalorder %s20, 0
    %p194 = por %p192, %p193
    %s195 = ssub.s32 %s14, %s21
    %p196 = scmp.eq.s32.totalorder %s195, 0
    %s198 = sadd.s32 %s197, 1
    %s199 = scalar_select %p196, %s197, %s198
    %p202 = pneg %p196
    %p203 = scmp.eq.s32.totalorder %s14, 1
    %p204 = por %p202, %p203
    %p205 = scmp.ne.s32.totalorder %s197, %s200
    %p206 = scmp.eq.s32.totalorder %s14, 0
    %p207 = por %p205, %p206
    %p208 = scmp.ne.s32.totalorder %s197, %s200
    %p209 = scmp.eq.s32.totalorder %s19, 1
    %p210 = por %p208, %p209
    %p211 = scmp.ne.s32.totalorder %s200, %s201
    %p212 = scmp.eq.s32.totalorder %s19, 0
    %p213 = por %p211, %p212
    %p214 = scmp.ne.s32.totalorder %s200, %s201
    %p215 = scmp.eq.s32.totalorder %s20, 1
    %p216 = por %p214, %p215
    %p218 = scmp.ne.s32.totalorder %s201, %s217
    %p219 = scmp.eq.s32.totalorder %s20, 0
    %p220 = por %p218, %p219
    %p221 = scmp.le.s32.totalorder 1, %s14
    %p222 = scmp.lt.s32.totalorder %s14, 3
    %p223 = pnand %p221, %p222
    %p224 = pneg %p223
    // Predicated region
    $region9: #{fed_contrastive_forward.1} parent=5 // pred_check
      _
    $region10: #{fed_contrastive_forward.1} parent=5 // pred_check_branch
      %226 = sbr.rel (%p223) target = $region12
    $region11: #{fed_contrastive_forward.1} parent=5 // pred_region
      %s227 = ssub.s32 %s14, 1
      // Predicated region
      $region13: #{fed_contrastive_forward.1} parent=11 // pred_check
        %p228 = pneg %p61
      $region14: #{fed_contrastive_forward.1} parent=11 // pred_check_branch
        %230 = sbr.rel (%p228) target = $region16
      $region15: #{fed_contrastive_forward.1} parent=11 // pred_region
        _
      $region16: #{fed_contrastive_forward.1} parent=11 // pred_fallthru
        _
      // Predicated region
      $region17: #{fed_contrastive_forward.1} parent=11 // pred_check
        %p231 = pneg %p82
      $region18: #{fed_contrastive_forward.1} parent=11 // pred_check_branch
        %233 = sbr.rel (%p231) target = $region20
      $region19: #{fed_contrastive_forward.1} parent=11 // pred_region
        _
      $region20: #{fed_contrastive_forward.1} parent=11 // pred_fallthru
        _
      // Predicated region
      $region21: #{fed_contrastive_forward.1} parent=11 // pred_check
        %p234 = pneg %p103
      $region22: #{fed_contrastive_forward.1} parent=11 // pred_check_branch
        %236 = sbr.rel (%p234) target = $region24
      $region23: #{fed_contrastive_forward.1} parent=11 // pred_region
        _
      $region24: #{fed_contrastive_forward.1} parent=11 // pred_fallthru
        _
      // Predicated region
      $region25: #{fed_contrastive_forward.1} parent=11 // pred_check
        %p237 = pneg %p124
      $region26: #{fed_contrastive_forward.1} parent=11 // pred_check_branch
        %239 = sbr.rel (%p237) target = $region28
      $region27: #{fed_contrastive_forward.1} parent=11 // pred_region
        _
      $region28: #{fed_contrastive_forward.1} parent=11 // pred_fallthru
        _
      // Predicated region
      $region29: #{fed_contrastive_forward.1} parent=11 // pred_check
        %p240 = pneg %p145
      $region30: #{fed_contrastive_forward.1} parent=11 // pred_check_branch
        %242 = sbr.rel (%p240) target = $region32
      $region31: #{fed_contrastive_forward.1} parent=11 // pred_region
        _
      $region32: #{fed_contrastive_forward.1} parent=11 // pred_fallthru
        _
      // Predicated region
      $region33: #{fed_contrastive_forward.1} parent=11 // pred_check
        %p243 = pneg %p166
      $region34: #{fed_contrastive_forward.1} parent=11 // pred_check_branch
        %245 = sbr.rel (%p243) target = $region36
      $region35: #{fed_contrastive_forward.1} parent=11 // pred_region
        _
      $region36: #{fed_contrastive_forward.1} parent=11 // pred_fallthru
        _
      // Predicated region
      $region37: #{fed_contrastive_forward.1} parent=11 // pred_check
        %p246 = pneg %p187
      $region38: #{fed_contrastive_forward.1} parent=11 // pred_check_branch
        %248 = sbr.rel (%p246) target = $region40
      $region39: #{fed_contrastive_forward.1} parent=11 // pred_region
        _
      $region40: #{fed_contrastive_forward.1} parent=11 // pred_fallthru
        _
    $region12: #{fed_contrastive_forward.1} parent=5 // pred_fallthru
      _
    %p249 = scmp.lt.s32.totalorder %s14, 2
    // Predicated region
    $region41: #{fed_contrastive_forward.1} parent=5 // pred_check
      %p250 = pneg %p249
    $region42: #{fed_contrastive_forward.1} parent=5 // pred_check_branch
      %252 = sbr.rel (%p250) target = $region44
    $region43: #{fed_contrastive_forward.1} parent=5 // pred_region
      // Predicated region
      $region45: #{fed_contrastive_forward.1} parent=43 // pred_check
        %p253 = pneg %p34
      $region46: #{fed_contrastive_forward.1} parent=43 // pred_check_branch
        %255 = sbr.rel (%p253) target = $region48
      $region47: #{fed_contrastive_forward.1} parent=43 // pred_region
        %p256 = scmp.lt.s32.totalorder %s14, 1
        %s257 = scalar_select %p256, %s14, 1
        %s258 = smul.addr %s257, 4
        %s259 = smul.addr %s258, 8
        %s260 = scalar_lea.vmem %s0, %s259
      $region48: #{fed_contrastive_forward.1} parent=43 // pred_fallthru
        _
    $region44: #{fed_contrastive_forward.1} parent=5 // pred_fallthru
      _
    %p261 = scmp.le.s32.totalorder 1, %s14
    %p262 = scmp.lt.s32.totalorder %s14, 3
    %p263 = pnand %p261, %p262
    %p264 = pneg %p263
    // Predicated region
    $region49: #{fed_contrastive_forward.1} parent=5 // pred_check
      _
    $region50: #{fed_contrastive_forward.1} parent=5 // pred_check_branch
      %266 = sbr.rel (%p263) target = $region52
    $region51: #{fed_contrastive_forward.1} parent=5 // pred_region
      %s267 = ssub.s32 %s14, 1
      %p268 = scmp.lt.s32.totalorder %s19, 1
      %s269 = scalar_select %p268, %s19, 1
      %s270 = smul.addr %s269, 4
      %s271 = smul.addr %s270, 8
      %s272 = scalar_lea.vmem %s0, %s271
      %p273 = pneg %p40
      %p274 = pneg %p37
      %p275 = pneg %p61
      %p276 = pneg %p58
      %p277 = pneg %p82
      %p278 = pneg %p79
      %p279 = pneg %p103
      %p280 = pneg %p100
      %p281 = pneg %p124
      %p282 = pneg %p121
      %p283 = pneg %p145
      %p284 = pneg %p142
      %p285 = pneg %p166
      %p286 = pneg %p163
      %p287 = pneg %p187
      %p288 = pneg %p184
      %p289 = pneg %p213
      %p290 = pneg %p210
      %p291 = scmp.lt.s32.totalorder %s19, 1
      %s292 = scalar_select %p291, %s19, 1
      %s293 = smul.addr %s292, 4
      %s294 = scalar_lea.vmem %s8, %s293
      %p295 = scmp.lt.s32.totalorder %s19, 1
      %s296 = scalar_select %p295, %s19, 1
      %s297 = smul.addr %s296, 4
      %s298 = smul.addr %s297, 8
      %s299 = scalar_lea.vmem %s0, %s298
      %p300 = scmp.lt.s32.totalorder %s19, 1
      %s301 = scalar_select %p300, %s19, 1
      %s302 = smul.addr %s301, 4
      %s303 = scalar_lea.vmem %s8, %s302
      %v304 = vld [vmem:[%s2] sm:$0x3]
      %v305 = vld [vmem:[%s4] sm:$0x3]
      %v306 = vld [vmem:[%s5] sm:$0xff]
      %v307 = vld [vmem:[%s5 + $0x8] sm:$0xf]
      %v308 = vld [vmem:[%s6] sm:$0xf]
      %v309 = vld [vmem:[%s7] sm:$0xff]
      %v310 = vld [vmem:[%s7 + $0x8] sm:$0xff]
      %v311 = vld [vmem:[%s7 + $0x10] sm:$0xff]
      %v312 = vld [vmem:[%s7 + $0x18] sm:$0xff]
      %v313 = vld [vmem:[%s7 + $0x20] sm:$0xff]
      %v314 = vld [vmem:[%s7 + $0x28] sm:$0xff]
      %v315 = vld [vmem:[%s7 + $0x30] sm:$0xff]
      %v316 = vld [vmem:[%s7 + $0x38] sm:$0xff]
      %v317 = vld [vmem:[%s7 + $0x40] sm:$0xff]
      %v318 = vld [vmem:[%s7 + $0x48] sm:$0xff]
      %v319 = vld [vmem:[%s7 + $0x50] sm:$0xff]
      %v320 = vld [vmem:[%s7 + $0x58] sm:$0xff]
      %v321 = vld [vmem:[%s7 + $0x60] sm:$0xff]
      %v322 = vld [vmem:[%s7 + $0x68] sm:$0xff]
      %v323 = vld [vmem:[%s7 + $0x70] sm:$0xff]
      %v324 = vld [vmem:[%s7 + $0x78] sm:$0xff]
      %v325 = vld [vmem:[%s7 + $0x80] sm:$0xff]
      %v326 = vld [vmem:[%s7 + $0x88] sm:$0xf]
      %v327 = vld [vmem:[%s299] sm:$0xff]
      %v328 = vld [vmem:[%s299 + $0x8] sm:$0xff]
      %v329 = vld [vmem:[%s299 + $0x10] sm:$0xff]
      %v330 = vld [vmem:[%s299 + $0x18] sm:$0xf]
      %v331 = vld [vmem:[%s1] sm:$0xff]
      %v332 = vld [vmem:[%s1 + $0x8] sm:$0xff]
      %v333 = vld [vmem:[%s1 + $0x10] sm:$0xff]
      %v334 = vld [vmem:[%s1 + $0x18] sm:$0xff]
      %v335 = vld [vmem:[%s1 + $0x20] sm:$0xff]
      %v336 = vld [vmem:[%s1 + $0x28] sm:$0xff]
      %v337 = vld [vmem:[%s1 + $0x30] sm:$0xf]
      %v338 = vld [vmem:[%s1 + $0x38] sm:$0xf]
      %s339 = scalar_lea.vmem %s1, 64
      %v340 = vld [vmem:[%s339] sm:$0xff]
      %v341 = vld [vmem:[%s339 + $0x8] sm:$0xff]
      %v342 = vld [vmem:[%s339 + $0x10] sm:$0xff]
      %v343 = vld [vmem:[%s339 + $0x18] sm:$0xff]
      %v344 = vld [vmem:[%s339 + $0x20] sm:$0xff]
      %v345 = vld [vmem:[%s339 + $0x28] sm:$0xff]
      %v346 = vld [vmem:[%s339 + $0x30] sm:$0xf]
      %v347 = vld [vmem:[%s339 + $0x38] sm:$0xf]
      %vm352 = vcmask 1046528
      %v353 = vrot.slane %v327, 1
      %v354 = vrot.slane %v328, 1
      %v355 = vsel %vm352, %v353, %v354
      %v356 = vrot.slane %v329, 1
      %v357 = vsel %vm352, %v354, %v356
      %v358 = vrot.slane %v330, 1
      %v359 = vsel %vm352, %v356, %v358
      %vm360 = vcmask 228352
      %v361 = vsel %vm360, %v355, 0
      %v363 = vsel %vm360, %v357, 0
      %v365 = vsel %vm360, %v359, 0
      %vm367 = vcmask 1043456
      %v369 = vsel %vm367, %v346, 0
      %v372 = vsel %vm367, %v347, 0
      %374 = vmatpush.msra.mxu0 0.0
      %375 = vmatpush.msra.mxu0 0.0
      %376 = vmatpush.msra.mxu0 0.0
      %377 = vmatpush.msra.mxu0 0.0
      %378 = vmatpush.msra.mxu0 0.0
      %379 = vmatpush.msra.mxu0 0.0
      %380 = vmatpush.msra.mxu0 0.0
      %381 = vmatpush.msra.mxu0 0.0
      %382 = vmatpush.msra.mxu0 0.0
      %383 = vmatpush.msra.mxu0 0.0
      %384 = vmatpush.msra.mxu0 0.0
      %385 = vmatpush.msra.mxu0 0.0
      %386 = vmatpush.msra.mxu0 %v369
      %387 = vmatpush.msra.mxu0 %v344
      %388 = vmatpush.msra.mxu0 %v342
      %389 = vmatpush.msra.mxu0 %v340
      %390 = vmatmul.f32.gmra.mxu0 %v361
      %v391 = vpop.f32.mrf.mxu0
      %v392 = vadd.f32 0.0, %v391
      %393 = vmatmul.f32.gmra.mxu0 %v363
      %v394 = vpop.f32.mrf.mxu0
      %v395 = vadd.f32 0.0, %v394
      %396 = vmatmul.f32.gmra.mxu0 %v365
      %v397 = vpop.f32.mrf.mxu0
      %v398 = vadd.f32 0.0, %v397
      %399 = vdwg.mxu0
      %400 = vmatpush.msra.mxu0 0.0
      %401 = vmatpush.msra.mxu0 0.0
      %402 = vmatpush.msra.mxu0 0.0
      %403 = vmatpush.msra.mxu0 0.0
      %404 = vmatpush.msra.mxu0 0.0
      %405 = vmatpush.msra.mxu0 0.0
      %406 = vmatpush.msra.mxu0 0.0
      %407 = vmatpush.msra.mxu0 0.0
      %408 = vmatpush.msra.mxu0 0.0
      %409 = vmatpush.msra.mxu0 0.0
      %410 = vmatpush.msra.mxu0 0.0
      %411 = vmatpush.msra.mxu0 0.0
      %412 = vmatpush.msra.mxu0 %v372
      %413 = vmatpush.msra.mxu0 %v345
      %414 = vmatpush.msra.mxu0 %v343
      %415 = vmatpush.msra.mxu0 %v341
      %416 = vmatmul.f32.gmra.mxu0 %v361
      %v417 = vpop.f32.mrf.mxu0
      %v418 = vadd.f32 0.0, %v417
      %419 = vmatmul.f32.gmra.mxu0 %v363
      %v420 = vpop.f32.mrf.mxu0
      %v421 = vadd.f32 0.0, %v420
      %422 = vmatmul.f32.gmra.mxu0 %v365
      %v423 = vpop.f32.mrf.mxu0
      %v424 = vadd.f32 0.0, %v423
      %425 = vdwg.mxu0
      %v426 = vsel %vm360, %v327, 0
      %v428 = vsel %vm360, %v328, 0
      %v430 = vsel %vm360, %v329, 0
      %v433 = vsel %vm367, %v337, 0
      %v436 = vsel %vm367, %v338, 0
      %438 = vmatpush.msra.mxu0 0.0
      %439 = vmatpush.msra.mxu0 0.0
      %440 = vmatpush.msra.mxu0 0.0
      %441 = vmatpush.msra.mxu0 0.0
      %442 = vmatpush.msra.mxu0 0.0
      %443 = vmatpush.msra.mxu0 0.0
      %444 = vmatpush.msra.mxu0 0.0
      %445 = vmatpush.msra.mxu0 0.0
      %446 = vmatpush.msra.mxu0 0.0
      %447 = vmatpush.msra.mxu0 0.0
      %448 = vmatpush.msra.mxu0 0.0
      %449 = vmatpush.msra.mxu0 0.0
      %450 = vmatpush.msra.mxu0 %v433
      %451 = vmatpush.msra.mxu0 %v335
      %452 = vmatpush.msra.mxu0 %v333
      %453 = vmatpush.msra.mxu0 %v331
      %454 = vmatmul.f32.gmra.mxu0 %v426
      %v455 = vpop.f32.mrf.mxu0
      %v456 = vadd.f32 %v392, %v455
      %457 = vmatmul.f32.gmra.mxu0 %v428
      %v458 = vpop.f32.mrf.mxu0
      %v459 = vadd.f32 %v395, %v458
      %460 = vmatmul.f32.gmra.mxu0 %v430
      %v461 = vpop.f32.mrf.mxu0
      %v462 = vadd.f32 %v398, %v461
      %463 = vdwg.mxu0
      %464 = vmatpush.msra.mxu0 0.0
      %465 = vmatpush.msra.mxu0 0.0
      %466 = vmatpush.msra.mxu0 0.0
      %467 = vmatpush.msra.mxu0 0.0
      %468 = vmatpush.msra.mxu0 0.0
      %469 = vmatpush.msra.mxu0 0.0
      %470 = vmatpush.msra.mxu0 0.0
      %471 = vmatpush.msra.mxu0 0.0
      %472 = vmatpush.msra.mxu0 0.0
      %473 = vmatpush.msra.mxu0 0.0
      %474 = vmatpush.msra.mxu0 0.0
      %475 = vmatpush.msra.mxu0 0.0
      %476 = vmatpush.msra.mxu0 %v436
      %477 = vmatpush.msra.mxu0 %v336
      %478 = vmatpush.msra.mxu0 %v334
      %479 = vmatpush.msra.mxu0 %v332
      %480 = vmatmul.f32.gmra.mxu0 %v426
      %v481 = vpop.f32.mrf.mxu0
      %v482 = vadd.f32 %v418, %v481
      %483 = vmatmul.f32.gmra.mxu0 %v428
      %v484 = vpop.f32.mrf.mxu0
      %v485 = vadd.f32 %v421, %v484
      %486 = vmatmul.f32.gmra.mxu0 %v430
      %v487 = vpop.f32.mrf.mxu0
      %v488 = vadd.f32 %v424, %v487
      %489 = vdwg.mxu0
      %s490 = scalar_lea.vmem %s1, 128
      %v491 = vld [vmem:[%s490] sm:$0xff]
      %v492 = vld [vmem:[%s490 + $0x8] sm:$0xff]
      %v493 = vld [vmem:[%s490 + $0x10] sm:$0xff]
      %v494 = vld [vmem:[%s490 + $0x18] sm:$0xff]
      %v495 = vld [vmem:[%s490 + $0x20] sm:$0xff]
      %v496 = vld [vmem:[%s490 + $0x28] sm:$0xff]
      %v497 = vld [vmem:[%s490 + $0x30] sm:$0xf]
      %v498 = vld [vmem:[%s490 + $0x38] sm:$0xf]
      %vm499 = vcmask 1045504
      %v500 = vrot.slane %v327, 2
      %v501 = vrot.slane %v328, 2
      %v502 = vsel %vm499, %v500, %v501
      %v503 = vrot.slane %v329, 2
      %v504 = vsel %vm499, %v501, %v503
      %v505 = vrot.slane %v330, 2
      %v506 = vsel %vm499, %v503, %v505
      %v507 = vsel %vm360, %v502, 0
      %v509 = vsel %vm360, %v504, 0
      %v511 = vsel %vm360, %v506, 0
      %v514 = vsel %vm367, %v497, 0
      %v517 = vsel %vm367, %v498, 0
      %519 = vmatpush.msra.mxu0 0.0
      %520 = vmatpush.msra.mxu0 0.0
      %521 = vmatpush.msra.mxu0 0.0
      %522 = vmatpush.msra.mxu0 0.0
      %523 = vmatpush.msra.mxu0 0.0
      %524 = vmatpush.msra.mxu0 0.0
      %525 = vmatpush.msra.mxu0 0.0
      %526 = vmatpush.msra.mxu0 0.0
      %527 = vmatpush.msra.mxu0 0.0
      %528 = vmatpush.msra.mxu0 0.0
      %529 = vmatpush.msra.mxu0 0.0
      %530 = vmatpush.msra.mxu0 0.0
      %531 = vmatpush.msra.mxu0 %v514
      %532 = vmatpush.msra.mxu0 %v495
      %533 = vmatpush.msra.mxu0 %v493
      %534 = vmatpush.msra.mxu0 %v491
      %535 = vmatmul.f32.gmra.mxu0 %v507
      %v536 = vpop.f32.mrf.mxu0
      %v537 = vadd.f32 0.0, %v536
      %538 = vmatmul.f32.gmra.mxu0 %v509
      %v539 = vpop.f32.mrf.mxu0
      %v540 = vadd.f32 0.0, %v539
      %541 = vmatmul.f32.gmra.mxu0 %v511
      %v542 = vpop.f32.mrf.mxu0
      %v543 = vadd.f32 0.0, %v542
      %544 = vdwg.mxu0
      %545 = vmatpush.msra.mxu0 0.0
      %546 = vmatpush.msra.mxu0 0.0
      %547 = vmatpush.msra.mxu0 0.0
      %548 = vmatpush.msra.mxu0 0.0
      %549 = vmatpush.msra.mxu0 0.0
      %550 = vmatpush.msra.mxu0 0.0
      %551 = vmatpush.msra.mxu0 0.0
      %552 = vmatpush.msra.mxu0 0.0
      %553 = vmatpush.msra.mxu0 0.0
      %554 = vmatpush.msra.mxu0 0.0
      %555 = vmatpush.msra.mxu0 0.0
      %556 = vmatpush.msra.mxu0 0.0
      %557 = vmatpush.msra.mxu0 %v517
      %558 = vmatpush.msra.mxu0 %v496
      %559 = vmatpush.msra.mxu0 %v494
      %560 = vmatpush.msra.mxu0 %v492
      %561 = vmatmul.f32.gmra.mxu0 %v507
      %v562 = vpop.f32.mrf.mxu0
      %v563 = vadd.f32 0.0, %v562
      %564 = vmatmul.f32.gmra.mxu0 %v509
      %v565 = vpop.f32.mrf.mxu0
      %v566 = vadd.f32 0.0, %v565
      %567 = vmatmul.f32.gmra.mxu0 %v511
      %v568 = vpop.f32.mrf.mxu0
      %v569 = vadd.f32 0.0, %v568
      %570 = vdwg.mxu0
      %v571 = vadd.f32 %v456, %v537
      %v572 = vadd.f32 %v482, %v563
      %v573 = vadd.f32 %v459, %v540
      %v574 = vadd.f32 %v485, %v566
      %v575 = vadd.f32 %v462, %v543
      %v576 = vadd.f32 %v488, %v569
      %s577 = scalar_lea.vmem %s1, 192
      %v578 = vld [vmem:[%s577] sm:$0xff]
      %v579 = vld [vmem:[%s577 + $0x8] sm:$0xff]
      %v580 = vld [vmem:[%s577 + $0x10] sm:$0xff]
      %v581 = vld [vmem:[%s577 + $0x18] sm:$0xff]
      %v582 = vld [vmem:[%s577 + $0x20] sm:$0xff]
      %v583 = vld [vmem:[%s577 + $0x28] sm:$0xff]
      %v584 = vld [vmem:[%s577 + $0x30] sm:$0xf]
      %v585 = vld [vmem:[%s577 + $0x38] sm:$0xf]
      %vm586 = vcmask 1044480
      %v587 = vrot.slane %v327, 3
      %v588 = vrot.slane %v328, 3
      %v589 = vsel %vm586, %v587, %v588
      %v590 = vrot.slane %v329, 3
      %v591 = vsel %vm586, %v588, %v590
      %v592 = vrot.slane %v330, 3
      %v593 = vsel %vm586, %v590, %v592
      %v594 = vsel %vm360, %v589, 0
      %v596 = vsel %vm360, %v591, 0
      %v598 = vsel %vm360, %v593, 0
      %v601 = vsel %vm367, %v584, 0
      %v604 = vsel %vm367, %v585, 0
      %606 = vmatpush.msra.mxu0 0.0
      %607 = vmatpush.msra.mxu0 0.0
      %608 = vmatpush.msra.mxu0 0.0
      %609 = vmatpush.msra.mxu0 0.0
      %610 = vmatpush.msra.mxu0 0.0
      %611 = vmatpush.msra.mxu0 0.0
      %612 = vmatpush.msra.mxu0 0.0
      %613 = vmatpush.msra.mxu0 0.0
      %614 = vmatpush.msra.mxu0 0.0
      %615 = vmatpush.msra.mxu0 0.0
      %616 = vmatpush.msra.mxu0 0.0
      %617 = vmatpush.msra.mxu0 0.0
      %618 = vmatpush.msra.mxu0 %v601
      %619 = vmatpush.msra.mxu0 %v582
      %620 = vmatpush.msra.mxu0 %v580
      %621 = vmatpush.msra.mxu0 %v578
      %622 = vmatmul.f32.gmra.mxu0 %v594
      %v623 = vpop.f32.mrf.mxu0
      %v624 = vadd.f32 0.0, %v623
      %625 = vmatmul.f32.gmra.mxu0 %v596
      %v626 = vpop.f32.mrf.mxu0
      %v627 = vadd.f32 0.0, %v626
      %628 = vmatmul.f32.gmra.mxu0 %v598
      %v629 = vpop.f32.mrf.mxu0
      %v630 = vadd.f32 0.0, %v629
      %631 = vdwg.mxu0
      %632 = vmatpush.msra.mxu0 0.0
      %633 = vmatpush.msra.mxu0 0.0
      %634 = vmatpush.msra.mxu0 0.0
      %635 = vmatpush.msra.mxu0 0.0
      %636 = vmatpush.msra.mxu0 0.0
      %637 = vmatpush.msra.mxu0 0.0
      %638 = vmatpush.msra.mxu0 0.0
      %639 = vmatpush.msra.mxu0 0.0
      %640 = vmatpush.msra.mxu0 0.0
      %641 = vmatpush.msra.mxu0 0.0
      %642 = vmatpush.msra.mxu0 0.0
      %643 = vmatpush.msra.mxu0 0.0
      %644 = vmatpush.msra.mxu0 %v604
      %645 = vmatpush.msra.mxu0 %v583
      %646 = vmatpush.msra.mxu0 %v581
      %647 = vmatpush.msra.mxu0 %v579
      %648 = vmatmul.f32.gmra.mxu0 %v594
      %v649 = vpop.f32.mrf.mxu0
      %v650 = vadd.f32 0.0, %v649
      %651 = vmatmul.f32.gmra.mxu0 %v596
      %v652 = vpop.f32.mrf.mxu0
      %v653 = vadd.f32 0.0, %v652
      %654 = vmatmul.f32.gmra.mxu0 %v598
      %v655 = vpop.f32.mrf.mxu0
      %v656 = vadd.f32 0.0, %v655
      %657 = vdwg.mxu0
      %v658 = vadd.f32 %v571, %v624
      %v659 = vadd.f32 %v572, %v650
      %v660 = vadd.f32 %v573, %v627
      %v661 = vadd.f32 %v574, %v653
      %v662 = vadd.f32 %v575, %v630
      %v663 = vadd.f32 %v576, %v656
      %s664 = scalar_lea.vmem %s1, 256
      %v665 = vld [vmem:[%s664] sm:$0xff]
      %v666 = vld [vmem:[%s664 + $0x8] sm:$0xff]
      %v667 = vld [vmem:[%s664 + $0x10] sm:$0xff]
      %v668 = vld [vmem:[%s664 + $0x18] sm:$0xff]
      %v669 = vld [vmem:[%s664 + $0x20] sm:$0xff]
      %v670 = vld [vmem:[%s664 + $0x28] sm:$0xff]
      %v671 = vld [vmem:[%s664 + $0x30] sm:$0xf]
      %v672 = vld [vmem:[%s664 + $0x38] sm:$0xf]
      %v673 = vrot.slane %v327, 4
      %v674 = vrot.slane %v328, 4
      %v675 = vsel %vm367, %v673, %v674
      %v676 = vrot.slane %v329, 4
      %v677 = vsel %vm367, %v674, %v676
      %v678 = vrot.slane %v330, 4
      %v679 = vsel %vm367, %v676, %v678
      %v680 = vsel %vm360, %v675, 0
      %v682 = vsel %vm360, %v677, 0
      %v684 = vsel %vm360, %v679, 0
      %v687 = vsel %vm367, %v671, 0
      %v690 = vsel %vm367, %v672, 0
      %692 = vmatpush.msra.mxu0 0.0
      %693 = vmatpush.msra.mxu0 0.0
      %694 = vmatpush.msra.mxu0 0.0
      %695 = vmatpush.msra.mxu0 0.0
      %696 = vmatpush.msra.mxu0 0.0
      %697 = vmatpush.msra.mxu0 0.0
      %698 = vmatpush.msra.mxu0 0.0
      %699 = vmatpush.msra.mxu0 0.0
      %700 = vmatpush.msra.mxu0 0.0
      %701 = vmatpush.msra.mxu0 0.0
      %702 = vmatpush.msra.mxu0 0.0
      %703 = vmatpush.msra.mxu0 0.0
      %704 = vmatpush.msra.mxu0 %v687
      %705 = vmatpush.msra.mxu0 %v669
      %706 = vmatpush.msra.mxu0 %v667
      %707 = vmatpush.msra.mxu0 %v665
      %708 = vmatmul.f32.gmra.mxu0 %v680
      %v709 = vpop.f32.mrf.mxu0
      %v710 = vadd.f32 0.0, %v709
      %711 = vmatmul.f32.gmra.mxu0 %v682
      %v712 = vpop.f32.mrf.mxu0
      %v713 = vadd.f32 0.0, %v712
      %714 = vmatmul.f32.gmra.mxu0 %v684
      %v715 = vpop.f32.mrf.mxu0
      %v716 = vadd.f32 0.0, %v715
      %717 = vdwg.mxu0
      %718 = vmatpush.msra.mxu0 0.0
      %719 = vmatpush.msra.mxu0 0.0
      %720 = vmatpush.msra.mxu0 0.0
      %721 = vmatpush.msra.mxu0 0.0
      %722 = vmatpush.msra.mxu0 0.0
      %723 = vmatpush.msra.mxu0 0.0
      %724 = vmatpush.msra.mxu0 0.0
      %725 = vmatpush.msra.mxu0 0.0
      %726 = vmatpush.msra.mxu0 0.0
      %727 = vmatpush.msra.mxu0 0.0
      %728 = vmatpush.msra.mxu0 0.0
      %729 = vmatpush.msra.mxu0 0.0
      %730 = vmatpush.msra.mxu0 %v690
      %731 = vmatpush.msra.mxu0 %v670
      %732 = vmatpush.msra.mxu0 %v668
      %733 = vmatpush.msra.mxu0 %v666
      %734 = vmatmul.f32.gmra.mxu0 %v680
      %v735 = vpop.f32.mrf.mxu0
      %v736 = vadd.f32 0.0, %v735
      %737 = vmatmul.f32.gmra.mxu0 %v682
      %v738 = vpop.f32.mrf.mxu0
      %v739 = vadd.f32 0.0, %v738
      %740 = vmatmul.f32.gmra.mxu0 %v684
      %v741 = vpop.f32.mrf.mxu0
      %v742 = vadd.f32 0.0, %v741
      %743 = vdwg.mxu0
      %v744 = vadd.f32 %v658, %v710
      %v745 = vadd.f32 %v659, %v736
      %v746 = vadd.f32 %v660, %v713
      %v747 = vadd.f32 %v661, %v739
      %v748 = vadd.f32 %v662, %v716
      %v749 = vadd.f32 %v663, %v742
      %756 = vrot.lane.b32.xlu0 %v744, 118
      %v757 = vpop.permute.xlu0 %756
      %758 = vrot.lane.b32.xlu0 %v745, 118
      %v759 = vpop.permute.xlu0 %758
      %760 = vrot.lane.b32.xlu0 %v746, 118
      %v761 = vpop.permute.xlu0 %760
      %762 = vrot.lane.b32.xlu0 %v747, 118
      %v763 = vpop.permute.xlu0 %762
      %764 = vrot.lane.b32.xlu0 %v748, 118
      %v765 = vpop.permute.xlu0 %764
      %766 = vrot.lane.b32.xlu0 %v749, 118
      %v767 = vpop.permute.xlu0 %766
      %vm768 = vcmask 965632
      %v769 = vsel %vm768, %v757, %v759
      %v770 = vsel %vm768, %v761, %v763
      %v771 = vsel %vm768, %v765, %v767
      %v778 = vmax.f32 %v744, %v769
      %v779 = vmax.f32 %v745, %v759
      %v780 = vmax.f32 %v746, %v770
      %v781 = vmax.f32 %v747, %v763
      %v782 = vmax.f32 %v748, %v771
      %v783 = vmax.f32 %v749, %v767
      %v790 = vrot.slane %v778, 1
      %v791 = vrot.slane %v780, 1
      %v792 = vsel %vm352, %v790, %v791
      %v793 = vrot.slane %v779, 1
      %v794 = vrot.slane %v781, 1
      %v795 = vsel %vm352, %v793, %v794
      %v796 = vrot.slane %v782, 1
      %v797 = vsel %vm352, %v791, %v796
      %v798 = vrot.slane %v783, 1
      %v799 = vsel %vm352, %v794, %v798
      %v806 = vmax.f32 %v778, %v792
      %v807 = vmax.f32 %v779, %v795
      %v808 = vmax.f32 %v780, %v797
      %v809 = vmax.f32 %v781, %v799
      %v810 = vmax.f32 %v782, %v796
      %v811 = vmax.f32 %v783, %v798
      %v813 = vperm.slane %v304, 0
      %v814 = vperm.slane %v304, 1
      %v817 = vadd.f32 %v806, %v813
      %v818 = vadd.f32 %v807, %v814
      %v819 = vadd.f32 %v808, %v813
      %v820 = vadd.f32 %v809, %v814
      %v821 = vadd.f32 %v810, %v813
      %v822 = vadd.f32 %v811, %v814
      %v823 = vmax.f32 %v817, 0.0
      %v824 = vmax.f32 %v818, 0.0
      %v825 = vmax.f32 %v819, 0.0
      %v826 = vmax.f32 %v820, 0.0
      %v827 = vmax.f32 %v821, 0.0
      %v828 = vmax.f32 %v822, 0.0
      %vm829 = vcmask 187392
      %v831 = vsel %vm829, %v306, 0
      %v834 = vsel %vm829, %v307, 0
      %v837 = vsel %vm352, %v827, 0
      %v840 = vsel %vm352, %v828, 0
      %842 = vmatpush.msra.mxu0 0.0
      %843 = vmatpush.msra.mxu0 0.0
      %844 = vmatpush.msra.mxu0 0.0
      %845 = vmatpush.msra.mxu0 0.0
      %846 = vmatpush.msra.mxu0 0.0
      %847 = vmatpush.msra.mxu0 0.0
      %848 = vmatpush.msra.mxu0 0.0
      %849 = vmatpush.msra.mxu0 0.0
      %850 = vmatpush.msra.mxu0 0.0
      %851 = vmatpush.msra.mxu0 0.0
      %852 = vmatpush.msra.mxu0 0.0
      %853 = vmatpush.msra.mxu0 0.0
      %854 = vmatpush.msra.mxu0 0.0
      %855 = vmatpush.msra.mxu0 %v837
      %856 = vmatpush.msra.mxu0 %v825
      %857 = vmatpush.msra.mxu0 %v823
      %858 = vmatmul.f32.gmra.mxu0 %v831
      %v859 = vpop.f32.mrf.mxu0
      %v860 = vadd.f32 0.0, %v859
      %861 = vmatmul.f32.gmra.mxu0 %v834
      %v862 = vpop.f32.mrf.mxu0
      %v863 = vadd.f32 0.0, %v862
      %864 = vdwg.mxu0
      %865 = vmatpush.msra.mxu0 0.0
      %866 = vmatpush.msra.mxu0 0.0
      %867 = vmatpush.msra.mxu0 0.0
      %868 = vmatpush.msra.mxu0 0.0
      %869 = vmatpush.msra.mxu0 0.0
      %870 = vmatpush.msra.mxu0 0.0
      %871 = vmatpush.msra.mxu0 0.0
      %872 = vmatpush.msra.mxu0 0.0
      %873 = vmatpush.msra.mxu0 0.0
      %874 = vmatpush.msra.mxu0 0.0
      %875 = vmatpush.msra.mxu0 0.0
      %876 = vmatpush.msra.mxu0 0.0
      %877 = vmatpush.msra.mxu0 0.0
      %878 = vmatpush.msra.mxu0 %v840
      %879 = vmatpush.msra.mxu0 %v826
      %880 = vmatpush.msra.mxu0 %v824
      %881 = vmatmul.f32.gmra.mxu0 %v831
      %v882 = vpop.f32.mrf.mxu0
      %v883 = vadd.f32 0.0, %v882
      %884 = vmatmul.f32.gmra.mxu0 %v834
      %v885 = vpop.f32.mrf.mxu0
      %v886 = vadd.f32 0.0, %v885
      %887 = vdwg.mxu0
      %v888 = vld [vmem:[%s3] sm:$0xff]
      %v889 = vld [vmem:[%s3 + $0x8] sm:$0xff]
      %v890 = vld [vmem:[%s3 + $0x10] sm:$0xff]
      %v891 = vld [vmem:[%s3 + $0x18] sm:$0xff]
      %v892 = vld [vmem:[%s3 + $0x20] sm:$0xff]
      %v893 = vld [vmem:[%s3 + $0x28] sm:$0xff]
      %v894 = vld [vmem:[%s3 + $0x30] sm:$0xff]
      %v895 = vld [vmem:[%s3 + $0x38] sm:$0xff]
      %v896 = vld [vmem:[%s3 + $0x40] sm:$0xff]
      %v897 = vld [vmem:[%s3 + $0x48] sm:$0xff]
      %v898 = vld [vmem:[%s3 + $0x50] sm:$0xff]
      %v899 = vld [vmem:[%s3 + $0x58] sm:$0xff]
      %v900 = vld [vmem:[%s3 + $0x60] sm:$0xff]
      %v901 = vld [vmem:[%s3 + $0x68] sm:$0xff]
      %v902 = vld [vmem:[%s3 + $0x70] sm:$0xff]
      %v903 = vld [vmem:[%s3 + $0x78] sm:$0xff]
      %v904 = vld [vmem:[%s3 + $0x80] sm:$0xff]
      %v905 = vld [vmem:[%s3 + $0x88] sm:$0xff]
      %v906 = vld [vmem:[%s3 + $0x90] sm:$0xff]
      %v907 = vld [vmem:[%s3 + $0x98] sm:$0xff]
      %v908 = vld [vmem:[%s3 + $0xa0] sm:$0xff]
      %v909 = vld [vmem:[%s3 + $0xa8] sm:$0xff]
      %v910 = vld [vmem:[%s3 + $0xb0] sm:$0xff]
      %v911 = vld [vmem:[%s3 + $0xb8] sm:$0xff]
      %v912 = vld [vmem:[%s3 + $0xc0] sm:$0xff]
      %v913 = vld [vmem:[%s3 + $0xc8] sm:$0xff]
      %v914 = vld [vmem:[%s3 + $0xd0] sm:$0xff]
      %v915 = vld [vmem:[%s3 + $0xd8] sm:$0xff]
      %v916 = vld [vmem:[%s3 + $0xe0] sm:$0xff]
      %v917 = vld [vmem:[%s3 + $0xe8] sm:$0xff]
      %v918 = vld [vmem:[%s3 + $0xf0] sm:$0xff]
      %v919 = vld [vmem:[%s3 + $0xf8] sm:$0xff]
      %v920 = vld [vmem:[%s3 + $0x100] sm:$0xff]
      %v921 = vld [vmem:[%s3 + $0x108] sm:$0xff]
      %v922 = vld [vmem:[%s3 + $0x110] sm:$0xff]
      %v923 = vld [vmem:[%s3 + $0x118] sm:$0xff]
      %v924 = vld [vmem:[%s3 + $0x120] sm:$0xff]
      %v925 = vld [vmem:[%s3 + $0x128] sm:$0xff]
      %v926 = vld [vmem:[%s3 + $0x130] sm:$0xff]
      %v927 = vld [vmem:[%s3 + $0x138] sm:$0xff]
      %v928 = vld [vmem:[%s3 + $0x140] sm:$0xff]
      %v929 = vld [vmem:[%s3 + $0x148] sm:$0xff]
      %v930 = vld [vmem:[%s3 + $0x150] sm:$0xff]
      %v931 = vld [vmem:[%s3 + $0x158] sm:$0xff]
      %v932 = vld [vmem:[%s3 + $0x160] sm:$0xff]
      %v933 = vld [vmem:[%s3 + $0x168] sm:$0xff]
      %v934 = vld [vmem:[%s3 + $0x170] sm:$0xff]
      %v935 = vld [vmem:[%s3 + $0x178] sm:$0xff]
      %v936 = vld [vmem:[%s3 + $0x180] sm:$0xff]
      %v937 = vld [vmem:[%s3 + $0x188] sm:$0xff]
      %v938 = vld [vmem:[%s3 + $0x190] sm:$0xff]
      %v939 = vld [vmem:[%s3 + $0x198] sm:$0xff]
      %v940 = vld [vmem:[%s3 + $0x1a0] sm:$0xff]
      %v941 = vld [vmem:[%s3 + $0x1a8] sm:$0xff]
      %v942 = vld [vmem:[%s3 + $0x1b0] sm:$0xff]
      %v943 = vld [vmem:[%s3 + $0x1b8] sm:$0xff]
      %v944 = vld [vmem:[%s3 + $0x1c0] sm:$0x3f]
      %v945 = vld [vmem:[%s3 + $0x1c8] sm:$0x3f]
      %s946 = scalar_lea.vmem %s3, 464
      %v947 = vld [vmem:[%s946] sm:$0xff]
      %v948 = vld [vmem:[%s946 + $0x8] sm:$0xff]
      %v949 = vld [vmem:[%s946 + $0x10] sm:$0xff]
      %v950 = vld [vmem:[%s946 + $0x18] sm:$0xff]
      %v951 = vld [vmem:[%s946 + $0x20] sm:$0xff]
      %v952 = vld [vmem:[%s946 + $0x28] sm:$0xff]
      %v953 = vld [vmem:[%s946 + $0x30] sm:$0xff]
      %v954 = vld [vmem:[%s946 + $0x38] sm:$0xff]
      %v955 = vld [vmem:[%s946 + $0x40] sm:$0xff]
      %v956 = vld [vmem:[%s946 + $0x48] sm:$0xff]
      %v957 = vld [vmem:[%s946 + $0x50] sm:$0xff]
      %v958 = vld [vmem:[%s946 + $0x58] sm:$0xff]
      %v959 = vld [vmem:[%s946 + $0x60] sm:$0xff]
      %v960 = vld [vmem:[%s946 + $0x68] sm:$0xff]
      %v961 = vld [vmem:[%s946 + $0x70] sm:$0xff]
      %v962 = vld [vmem:[%s946 + $0x78] sm:$0xff]
      %v963 = vld [vmem:[%s946 + $0x80] sm:$0xff]
      %v964 = vld [vmem:[%s946 + $0x88] sm:$0xff]
      %v965 = vld [vmem:[%s946 + $0x90] sm:$0xff]
      %v966 = vld [vmem:[%s946 + $0x98] sm:$0xff]
      %v967 = vld [vmem:[%s946 + $0xa0] sm:$0xff]
      %v968 = vld [vmem:[%s946 + $0xa8] sm:$0xff]
      %v969 = vld [vmem:[%s946 + $0xb0] sm:$0xff]
      %v970 = vld [vmem:[%s946 + $0xb8] sm:$0xff]
      %v971 = vld [vmem:[%s946 + $0xc0] sm:$0xff]
      %v972 = vld [vmem:[%s946 + $0xc8] sm:$0xff]
      %v973 = vld [vmem:[%s946 + $0xd0] sm:$0xff]
      %v974 = vld [vmem:[%s946 + $0xd8] sm:$0xff]
      %v975 = vld [vmem:[%s946 + $0xe0] sm:$0xff]
      %v976 = vld [vmem:[%s946 + $0xe8] sm:$0xff]
      %v977 = vld [vmem:[%s946 + $0xf0] sm:$0xff]
      %v978 = vld [vmem:[%s946 + $0xf8] sm:$0xff]
      %v979 = vld [vmem:[%s946 + $0x100] sm:$0xff]
      %v980 = vld [vmem:[%s946 + $0x108] sm:$0xff]
      %v981 = vld [vmem:[%s946 + $0x110] sm:$0xff]
      %v982 = vld [vmem:[%s946 + $0x118] sm:$0xff]
      %v983 = vld [vmem:[%s946 + $0x120] sm:$0xff]
      %v984 = vld [vmem:[%s946 + $0x128] sm:$0xff]
      %v985 = vld [vmem:[%s946 + $0x130] sm:$0xff]
      %v986 = vld [vmem:[%s946 + $0x138] sm:$0xff]
      %v987 = vld [vmem:[%s946 + $0x140] sm:$0xff]
      %v988 = vld [vmem:[%s946 + $0x148] sm:$0xff]
      %v989 = vld [vmem:[%s946 + $0x150] sm:$0xff]
      %v990 = vld [vmem:[%s946 + $0x158] sm:$0xff]
      %v991 = vld [vmem:[%s946 + $0x160] sm:$0xff]
      %v992 = vld [vmem:[%s946 + $0x168] sm:$0xff]
      %v993 = vld [vmem:[%s946 + $0x170] sm:$0xff]
      %v994 = vld [vmem:[%s946 + $0x178] sm:$0xff]
      %v995 = vld [vmem:[%s946 + $0x180] sm:$0xff]
      %v996 = vld [vmem:[%s946 + $0x188] sm:$0xff]
      %v997 = vld [vmem:[%s946 + $0x190] sm:$0xff]
      %v998 = vld [vmem:[%s946 + $0x198] sm:$0xff]
      %v999 = vld [vmem:[%s946 + $0x1a0] sm:$0xff]
      %v1000 = vld [vmem:[%s946 + $0x1a8] sm:$0xff]
      %v1001 = vld [vmem:[%s946 + $0x1b0] sm:$0xff]
      %v1002 = vld [vmem:[%s946 + $0x1b8] sm:$0xff]
      %v1003 = vld [vmem:[%s946 + $0x1c0] sm:$0x3f]
      %v1004 = vld [vmem:[%s946 + $0x1c8] sm:$0x3f]
      %v1009 = vrot.slane %v860, 1
      %v1010 = vrot.slane %v863, 1
      %v1011 = vsel %vm352, %v1009, %v1010
      %v1012 = vrot.slane %v883, 1
      %v1013 = vrot.slane %v886, 1
      %v1014 = vsel %vm352, %v1012, %v1013
      %vm1016 = vcmask 834560
      %v1017 = vsel %vm1016, %v1014, 0
      %v1020 = vsel %vm499, %v1003, 0
      %v1023 = vsel %vm499, %v1004, 0
      %1025 = vmatpush.msra.mxu0 %v977
      %1026 = vmatpush.msra.mxu0 %v975
      %1027 = vmatpush.msra.mxu0 %v973
      %1028 = vmatpush.msra.mxu0 %v971
      %1029 = vmatpush.msra.mxu0 %v969
      %1030 = vmatpush.msra.mxu0 %v967
      %1031 = vmatpush.msra.mxu0 %v965
      %1032 = vmatpush.msra.mxu0 %v963
      %1033 = vmatpush.msra.mxu0 %v961
      %1034 = vmatpush.msra.mxu0 %v959
      %1035 = vmatpush.msra.mxu0 %v957
      %1036 = vmatpush.msra.mxu0 %v955
      %1037 = vmatpush.msra.mxu0 %v953
      %1038 = vmatpush.msra.mxu0 %v951
      %1039 = vmatpush.msra.mxu0 %v949
      %1040 = vmatpush.msra.mxu0 %v947
      %1041 = vmatmul.f32.gmra.mxu0 %v1011
      %v1042 = vpop.f32.mrf.mxu0
      %v1043 = vadd.f32 0.0, %v1042
      %1044 = vdwg.mxu0
      %1045 = vmatpush.msra.mxu0 0.0
      %1046 = vmatpush.msra.mxu0 0.0
      %1047 = vmatpush.msra.mxu0 0.0
      %1048 = vmatpush.msra.mxu0 %v1020
      %1049 = vmatpush.msra.mxu0 %v1001
      %1050 = vmatpush.msra.mxu0 %v999
      %1051 = vmatpush.msra.mxu0 %v997
      %1052 = vmatpush.msra.mxu0 %v995
      %1053 = vmatpush.msra.mxu0 %v993
      %1054 = vmatpush.msra.mxu0 %v991
      %1055 = vmatpush.msra.mxu0 %v989
      %1056 = vmatpush.msra.mxu0 %v987
      %1057 = vmatpush.msra.mxu0 %v985
      %1058 = vmatpush.msra.mxu0 %v983
      %1059 = vmatpush.msra.mxu0 %v981
      %1060 = vmatpush.msra.mxu0 %v979
      %1061 = vmatmul.f32.gmra.mxu0 %v1017
      %v1062 = vpop.f32.mrf.mxu0
      %v1063 = vadd.f32 %v1043, %v1062
      %1064 = vdwg.mxu0
      %1065 = vmatpush.msra.mxu0 %v978
      %1066 = vmatpush.msra.mxu0 %v976
      %1067 = vmatpush.msra.mxu0 %v974
      %1068 = vmatpush.msra.mxu0 %v972
      %1069 = vmatpush.msra.mxu0 %v970
      %1070 = vmatpush.msra.mxu0 %v968
      %1071 = vmatpush.msra.mxu0 %v966
      %1072 = vmatpush.msra.mxu0 %v964
      %1073 = vmatpush.msra.mxu0 %v962
      %1074 = vmatpush.msra.mxu0 %v960
      %1075 = vmatpush.msra.mxu0 %v958
      %1076 = vmatpush.msra.mxu0 %v956
      %1077 = vmatpush.msra.mxu0 %v954
      %1078 = vmatpush.msra.mxu0 %v952
      %1079 = vmatpush.msra.mxu0 %v950
      %1080 = vmatpush.msra.mxu0 %v948
      %1081 = vmatmul.f32.gmra.mxu0 %v1011
      %v1082 = vpop.f32.mrf.mxu0
      %v1083 = vadd.f32 0.0, %v1082
      %1084 = vdwg.mxu0
      %1085 = vmatpush.msra.mxu0 0.0
      %1086 = vmatpush.msra.mxu0 0.0
      %1087 = vmatpush.msra.mxu0 0.0
      %1088 = vmatpush.msra.mxu0 %v1023
      %1089 = vmatpush.msra.mxu0 %v1002
      %1090 = vmatpush.msra.mxu0 %v1000
      %1091 = vmatpush.msra.mxu0 %v998
      %1092 = vmatpush.msra.mxu0 %v996
      %1093 = vmatpush.msra.mxu0 %v994
      %1094 = vmatpush.msra.mxu0 %v992
      %1095 = vmatpush.msra.mxu0 %v990
      %1096 = vmatpush.msra.mxu0 %v988
      %1097 = vmatpush.msra.mxu0 %v986
      %1098 = vmatpush.msra.mxu0 %v984
      %1099 = vmatpush.msra.mxu0 %v982
      %1100 = vmatpush.msra.mxu0 %v980
      %1101 = vmatmul.f32.gmra.mxu0 %v1017
      %v1102 = vpop.f32.mrf.mxu0
      %v1103 = vadd.f32 %v1083, %v1102
      %1104 = vdwg.mxu0
      %v1105 = vsel %vm1016, %v883, 0
      %v1108 = vsel %vm499, %v944, 0
      %v1111 = vsel %vm499, %v945, 0
      %1113 = vmatpush.msra.mxu0 %v918
      %1114 = vmatpush.msra.mxu0 %v916
      %1115 = vmatpush.msra.mxu0 %v914
      %1116 = vmatpush.msra.mxu0 %v912
      %1117 = vmatpush.msra.mxu0 %v910
      %1118 = vmatpush.msra.mxu0 %v908
      %1119 = vmatpush.msra.mxu0 %v906
      %1120 = vmatpush.msra.mxu0 %v904
      %1121 = vmatpush.msra.mxu0 %v902
      %1122 = vmatpush.msra.mxu0 %v900
      %1123 = vmatpush.msra.mxu0 %v898
      %1124 = vmatpush.msra.mxu0 %v896
      %1125 = vmatpush.msra.mxu0 %v894
      %1126 = vmatpush.msra.mxu0 %v892
      %1127 = vmatpush.msra.mxu0 %v890
      %1128 = vmatpush.msra.mxu0 %v888
      %1129 = vmatmul.f32.gmra.mxu0 %v860
      %v1130 = vpop.f32.mrf.mxu0
      %v1131 = vadd.f32 %v1063, %v1130
      %1132 = vdwg.mxu0
      %1133 = vmatpush.msra.mxu0 0.0
      %1134 = vmatpush.msra.mxu0 0.0
      %1135 = vmatpush.msra.mxu0 0.0
      %1136 = vmatpush.msra.mxu0 %v1108
      %1137 = vmatpush.msra.mxu0 %v942
      %1138 = vmatpush.msra.mxu0 %v940
      %1139 = vmatpush.msra.mxu0 %v938
      %1140 = vmatpush.msra.mxu0 %v936
      %1141 = vmatpush.msra.mxu0 %v934
      %1142 = vmatpush.msra.mxu0 %v932
      %1143 = vmatpush.msra.mxu0 %v930
      %1144 = vmatpush.msra.mxu0 %v928
      %1145 = vmatpush.msra.mxu0 %v926
      %1146 = vmatpush.msra.mxu0 %v924
      %1147 = vmatpush.msra.mxu0 %v922
      %1148 = vmatpush.msra.mxu0 %v920
      %1149 = vmatmul.f32.gmra.mxu0 %v1105
      %v1150 = vpop.f32.mrf.mxu0
      %v1151 = vadd.f32 %v1131, %v1150
      %1152 = vdwg.mxu0
      %1153 = vmatpush.msra.mxu0 %v919
      %1154 = vmatpush.msra.mxu0 %v917
      %1155 = vmatpush.msra.mxu0 %v915
      %1156 = vmatpush.msra.mxu0 %v913
      %1157 = vmatpush.msra.mxu0 %v911
      %1158 = vmatpush.msra.mxu0 %v909
      %1159 = vmatpush.msra.mxu0 %v907
      %1160 = vmatpush.msra.mxu0 %v905
      %1161 = vmatpush.msra.mxu0 %v903
      %1162 = vmatpush.msra.mxu0 %v901
      %1163 = vmatpush.msra.mxu0 %v899
      %1164 = vmatpush.msra.mxu0 %v897
      %1165 = vmatpush.msra.mxu0 %v895
      %1166 = vmatpush.msra.mxu0 %v893
      %1167 = vmatpush.msra.mxu0 %v891
      %1168 = vmatpush.msra.mxu0 %v889
      %1169 = vmatmul.f32.gmra.mxu0 %v860
      %v1170 = vpop.f32.mrf.mxu0
      %v1171 = vadd.f32 %v1103, %v1170
      %1172 = vdwg.mxu0
      %1173 = vmatpush.msra.mxu0 0.0
      %1174 = vmatpush.msra.mxu0 0.0
      %1175 = vmatpush.msra.mxu0 0.0
      %1176 = vmatpush.msra.mxu0 %v1111
      %1177 = vmatpush.msra.mxu0 %v943
      %1178 = vmatpush.msra.mxu0 %v941
      %1179 = vmatpush.msra.mxu0 %v939
      %1180 = vmatpush.msra.mxu0 %v937
      %1181 = vmatpush.msra.mxu0 %v935
      %1182 = vmatpush.msra.mxu0 %v933
      %1183 = vmatpush.msra.mxu0 %v931
      %1184 = vmatpush.msra.mxu0 %v929
      %1185 = vmatpush.msra.mxu0 %v927
      %1186 = vmatpush.msra.mxu0 %v925
      %1187 = vmatpush.msra.mxu0 %v923
      %1188 = vmatpush.msra.mxu0 %v921
      %1189 = vmatmul.f32.gmra.mxu0 %v1105
      %v1190 = vpop.f32.mrf.mxu0
      %v1191 = vadd.f32 %v1171, %v1190
      %1192 = vdwg.mxu0
      %s1193 = scalar_lea.vmem %s3, 928
      %v1194 = vld [vmem:[%s1193] sm:$0xff]
      %v1195 = vld [vmem:[%s1193 + $0x8] sm:$0xff]
      %v1196 = vld [vmem:[%s1193 + $0x10] sm:$0xff]
      %v1197 = vld [vmem:[%s1193 + $0x18] sm:$0xff]
      %v1198 = vld [vmem:[%s1193 + $0x20] sm:$0xff]
      %v1199 = vld [vmem:[%s1193 + $0x28] sm:$0xff]
      %v1200 = vld [vmem:[%s1193 + $0x30] sm:$0xff]
      %v1201 = vld [vmem:[%s1193 + $0x38] sm:$0xff]
      %v1202 = vld [vmem:[%s1193 + $0x40] sm:$0xff]
      %v1203 = vld [vmem:[%s1193 + $0x48] sm:$0xff]
      %v1204 = vld [vmem:[%s1193 + $0x50] sm:$0xff]
      %v1205 = vld [vmem:[%s1193 + $0x58] sm:$0xff]
      %v1206 = vld [vmem:[%s1193 + $0x60] sm:$0xff]
      %v1207 = vld [vmem:[%s1193 + $0x68] sm:$0xff]
      %v1208 = vld [vmem:[%s1193 + $0x70] sm:$0xff]
      %v1209 = vld [vmem:[%s1193 + $0x78] sm:$0xff]
      %v1210 = vld [vmem:[%s1193 + $0x80] sm:$0xff]
      %v1211 = vld [vmem:[%s1193 + $0x88] sm:$0xff]
      %v1212 = vld [vmem:[%s1193 + $0x90] sm:$0xff]
      %v1213 = vld [vmem:[%s1193 + $0x98] sm:$0xff]
      %v1214 = vld [vmem:[%s1193 + $0xa0] sm:$0xff]
      %v1215 = vld [vmem:[%s1193 + $0xa8] sm:$0xff]
      %v1216 = vld [vmem:[%s1193 + $0xb0] sm:$0xff]
      %v1217 = vld [vmem:[%s1193 + $0xb8] sm:$0xff]
      %v1218 = vld [vmem:[%s1193 + $0xc0] sm:$0xff]
      %v1219 = vld [vmem:[%s1193 + $0xc8] sm:$0xff]
      %v1220 = vld [vmem:[%s1193 + $0xd0] sm:$0xff]
      %v1221 = vld [vmem:[%s1193 + $0xd8] sm:$0xff]
      %v1222 = vld [vmem:[%s1193 + $0xe0] sm:$0xff]
      %v1223 = vld [vmem:[%s1193 + $0xe8] sm:$0xff]
      %v1224 = vld [vmem:[%s1193 + $0xf0] sm:$0xff]
      %v1225 = vld [vmem:[%s1193 + $0xf8] sm:$0xff]
      %v1226 = vld [vmem:[%s1193 + $0x100] sm:$0xff]
      %v1227 = vld [vmem:[%s1193 + $0x108] sm:$0xff]
      %v1228 = vld [vmem:[%s1193 + $0x110] sm:$0xff]
      %v1229 = vld [vmem:[%s1193 + $0x118] sm:$0xff]
      %v1230 = vld [vmem:[%s1193 + $0x120] sm:$0xff]
      %v1231 = vld [vmem:[%s1193 + $0x128] sm:$0xff]
      %v1232 = vld [vmem:[%s1193 + $0x130] sm:$0xff]
      %v1233 = vld [vmem:[%s1193 + $0x138] sm:$0xff]
      %v1234 = vld [vmem:[%s1193 + $0x140] sm:$0xff]
      %v1235 = vld [vmem:[%s1193 + $0x148] sm:$0xff]
      %v1236 = vld [vmem:[%s1193 + $0x150] sm:$0xff]
      %v1237 = vld [vmem:[%s1193 + $0x158] sm:$0xff]
      %v1238 = vld [vmem:[%s1193 + $0x160] sm:$0xff]
      %v1239 = vld [vmem:[%s1193 + $0x168] sm:$0xff]
      %v1240 = vld [vmem:[%s1193 + $0x170] sm:$0xff]
      %v1241 = vld [vmem:[%s1193 + $0x178] sm:$0xff]
      %v1242 = vld [vmem:[%s1193 + $0x180] sm:$0xff]
      %v1243 = vld [vmem:[%s1193 + $0x188] sm:$0xff]
      %v1244 = vld [vmem:[%s1193 + $0x190] sm:$0xff]
      %v1245 = vld [vmem:[%s1193 + $0x198] sm:$0xff]
      %v1246 = vld [vmem:[%s1193 + $0x1a0] sm:$0xff]
      %v1247 = vld [vmem:[%s1193 + $0x1a8] sm:$0xff]
      %v1248 = vld [vmem:[%s1193 + $0x1b0] sm:$0xff]
      %v1249 = vld [vmem:[%s1193 + $0x1b8] sm:$0xff]
      %v1250 = vld [vmem:[%s1193 + $0x1c0] sm:$0x3f]
      %v1251 = vld [vmem:[%s1193 + $0x1c8] sm:$0x3f]
      %v1252 = vrot.slane %v860, 2
      %v1253 = vrot.slane %v863, 2
      %v1254 = vsel %vm499, %v1252, %v1253
      %v1255 = vrot.slane %v883, 2
      %v1256 = vrot.slane %v886, 2
      %v1257 = vsel %vm499, %v1255, %v1256
      %v1259 = vsel %vm1016, %v1257, 0
      %v1262 = vsel %vm499, %v1250, 0
      %v1265 = vsel %vm499, %v1251, 0
      %1267 = vmatpush.msra.mxu0 %v1224
      %1268 = vmatpush.msra.mxu0 %v1222
      %1269 = vmatpush.msra.mxu0 %v1220
      %1270 = vmatpush.msra.mxu0 %v1218
      %1271 = vmatpush.msra.mxu0 %v1216
      %1272 = vmatpush.msra.mxu0 %v1214
      %1273 = vmatpush.msra.mxu0 %v1212
      %1274 = vmatpush.msra.mxu0 %v1210
      %1275 = vmatpush.msra.mxu0 %v1208
      %1276 = vmatpush.msra.mxu0 %v1206
      %1277 = vmatpush.msra.mxu0 %v1204
      %1278 = vmatpush.msra.mxu0 %v1202
      %1279 = vmatpush.msra.mxu0 %v1200
      %1280 = vmatpush.msra.mxu0 %v1198
      %1281 = vmatpush.msra.mxu0 %v1196
      %1282 = vmatpush.msra.mxu0 %v1194
      %1283 = vmatmul.f32.gmra.mxu0 %v1254
      %v1284 = vpop.f32.mrf.mxu0
      %v1285 = vadd.f32 0.0, %v1284
      %1286 = vdwg.mxu0
      %1287 = vmatpush.msra.mxu0 0.0
      %1288 = vmatpush.msra.mxu0 0.0
      %1289 = vmatpush.msra.mxu0 0.0
      %1290 = vmatpush.msra.mxu0 %v1262
      %1291 = vmatpush.msra.mxu0 %v1248
      %1292 = vmatpush.msra.mxu0 %v1246
      %1293 = vmatpush.msra.mxu0 %v1244
      %1294 = vmatpush.msra.mxu0 %v1242
      %1295 = vmatpush.msra.mxu0 %v1240
      %1296 = vmatpush.msra.mxu0 %v1238
      %1297 = vmatpush.msra.mxu0 %v1236
      %1298 = vmatpush.msra.mxu0 %v1234
      %1299 = vmatpush.msra.mxu0 %v1232
      %1300 = vmatpush.msra.mxu0 %v1230
      %1301 = vmatpush.msra.mxu0 %v1228
      %1302 = vmatpush.msra.mxu0 %v1226
      %1303 = vmatmul.f32.gmra.mxu0 %v1259
      %v1304 = vpop.f32.mrf.mxu0
      %v1305 = vadd.f32 %v1285, %v1304
      %1306 = vdwg.mxu0
      %1307 = vmatpush.msra.mxu0 %v1225
      %1308 = vmatpush.msra.mxu0 %v1223
      %1309 = vmatpush.msra.mxu0 %v1221
      %1310 = vmatpush.msra.mxu0 %v1219
      %1311 = vmatpush.msra.mxu0 %v1217
      %1312 = vmatpush.msra.mxu0 %v1215
      %1313 = vmatpush.msra.mxu0 %v1213
      %1314 = vmatpush.msra.mxu0 %v1211
      %1315 = vmatpush.msra.mxu0 %v1209
      %1316 = vmatpush.msra.mxu0 %v1207
      %1317 = vmatpush.msra.mxu0 %v1205
      %1318 = vmatpush.msra.mxu0 %v1203
      %1319 = vmatpush.msra.mxu0 %v1201
      %1320 = vmatpush.msra.mxu0 %v1199
      %1321 = vmatpush.msra.mxu0 %v1197
      %1322 = vmatpush.msra.mxu0 %v1195
      %1323 = vmatmul.f32.gmra.mxu0 %v1254
      %v1324 = vpop.f32.mrf.mxu0
      %v1325 = vadd.f32 0.0, %v1324
      %1326 = vdwg.mxu0
      %1327 = vmatpush.msra.mxu0 0.0
      %1328 = vmatpush.msra.mxu0 0.0
      %1329 = vmatpush.msra.mxu0 0.0
      %1330 = vmatpush.msra.mxu0 %v1265
      %1331 = vmatpush.msra.mxu0 %v1249
      %1332 = vmatpush.msra.mxu0 %v1247
      %1333 = vmatpush.msra.mxu0 %v1245
      %1334 = vmatpush.msra.mxu0 %v1243
      %1335 = vmatpush.msra.mxu0 %v1241
      %1336 = vmatpush.msra.mxu0 %v1239
      %1337 = vmatpush.msra.mxu0 %v1237
      %1338 = vmatpush.msra.mxu0 %v1235
      %1339 = vmatpush.msra.mxu0 %v1233
      %1340 = vmatpush.msra.mxu0 %v1231
      %1341 = vmatpush.msra.mxu0 %v1229
      %1342 = vmatpush.msra.mxu0 %v1227
      %1343 = vmatmul.f32.gmra.mxu0 %v1259
      %v1344 = vpop.f32.mrf.mxu0
      %v1345 = vadd.f32 %v1325, %v1344
      %1346 = vdwg.mxu0
      %v1347 = vadd.f32 %v1151, %v1305
      %v1348 = vadd.f32 %v1191, %v1345
      %s1349 = scalar_lea.vmem %s3, 1392
      %v1350 = vld [vmem:[%s1349] sm:$0xff]
      %v1351 = vld [vmem:[%s1349 + $0x8] sm:$0xff]
      %v1352 = vld [vmem:[%s1349 + $0x10] sm:$0xff]
      %v1353 = vld [vmem:[%s1349 + $0x18] sm:$0xff]
      %v1354 = vld [vmem:[%s1349 + $0x20] sm:$0xff]
      %v1355 = vld [vmem:[%s1349 + $0x28] sm:$0xff]
      %v1356 = vld [vmem:[%s1349 + $0x30] sm:$0xff]
      %v1357 = vld [vmem:[%s1349 + $0x38] sm:$0xff]
      %v1358 = vld [vmem:[%s1349 + $0x40] sm:$0xff]
      %v1359 = vld [vmem:[%s1349 + $0x48] sm:$0xff]
      %v1360 = vld [vmem:[%s1349 + $0x50] sm:$0xff]
      %v1361 = vld [vmem:[%s1349 + $0x58] sm:$0xff]
      %v1362 = vld [vmem:[%s1349 + $0x60] sm:$0xff]
      %v1363 = vld [vmem:[%s1349 + $0x68] sm:$0xff]
      %v1364 = vld [vmem:[%s1349 + $0x70] sm:$0xff]
      %v1365 = vld [vmem:[%s1349 + $0x78] sm:$0xff]
      %v1366 = vld [vmem:[%s1349 + $0x80] sm:$0xff]
      %v1367 = vld [vmem:[%s1349 + $0x88] sm:$0xff]
      %v1368 = vld [vmem:[%s1349 + $0x90] sm:$0xff]
      %v1369 = vld [vmem:[%s1349 + $0x98] sm:$0xff]
      %v1370 = vld [vmem:[%s1349 + $0xa0] sm:$0xff]
      %v1371 = vld [vmem:[%s1349 + $0xa8] sm:$0xff]
      %v1372 = vld [vmem:[%s1349 + $0xb0] sm:$0xff]
      %v1373 = vld [vmem:[%s1349 + $0xb8] sm:$0xff]
      %v1374 = vld [vmem:[%s1349 + $0xc0] sm:$0xff]
      %v1375 = vld [vmem:[%s1349 + $0xc8] sm:$0xff]
      %v1376 = vld [vmem:[%s1349 + $0xd0] sm:$0xff]
      %v1377 = vld [vmem:[%s1349 + $0xd8] sm:$0xff]
      %v1378 = vld [vmem:[%s1349 + $0xe0] sm:$0xff]
      %v1379 = vld [vmem:[%s1349 + $0xe8] sm:$0xff]
      %v1380 = vld [vmem:[%s1349 + $0xf0] sm:$0xff]
      %v1381 = vld [vmem:[%s1349 + $0xf8] sm:$0xff]
      %v1382 = vld [vmem:[%s1349 + $0x100] sm:$0xff]
      %v1383 = vld [vmem:[%s1349 + $0x108] sm:$0xff]
      %v1384 = vld [vmem:[%s1349 + $0x110] sm:$0xff]
      %v1385 = vld [vmem:[%s1349 + $0x118] sm:$0xff]
      %v1386 = vld [vmem:[%s1349 + $0x120] sm:$0xff]
      %v1387 = vld [vmem:[%s1349 + $0x128] sm:$0xff]
      %v1388 = vld [vmem:[%s1349 + $0x130] sm:$0xff]
      %v1389 = vld [vmem:[%s1349 + $0x138] sm:$0xff]
      %v1390 = vld [vmem:[%s1349 + $0x140] sm:$0xff]
      %v1391 = vld [vmem:[%s1349 + $0x148] sm:$0xff]
      %v1392 = vld [vmem:[%s1349 + $0x150] sm:$0xff]
      %v1393 = vld [vmem:[%s1349 + $0x158] sm:$0xff]
      %v1394 = vld [vmem:[%s1349 + $0x160] sm:$0xff]
      %v1395 = vld [vmem:[%s1349 + $0x168] sm:$0xff]
      %v1396 = vld [vmem:[%s1349 + $0x170] sm:$0xff]
      %v1397 = vld [vmem:[%s1349 + $0x178] sm:$0xff]
      %v1398 = vld [vmem:[%s1349 + $0x180] sm:$0xff]
      %v1399 = vld [vmem:[%s1349 + $0x188] sm:$0xff]
      %v1400 = vld [vmem:[%s1349 + $0x190] sm:$0xff]
      %v1401 = vld [vmem:[%s1349 + $0x198] sm:$0xff]
      %v1402 = vld [vmem:[%s1349 + $0x1a0] sm:$0xff]
      %v1403 = vld [vmem:[%s1349 + $0x1a8] sm:$0xff]
      %v1404 = vld [vmem:[%s1349 + $0x1b0] sm:$0xff]
      %v1405 = vld [vmem:[%s1349 + $0x1b8] sm:$0xff]
      %v1406 = vld [vmem:[%s1349 + $0x1c0] sm:$0x3f]
      %v1407 = vld [vmem:[%s1349 + $0x1c8] sm:$0x3f]
      %v1408 = vrot.slane %v860, 3
      %v1409 = vrot.slane %v863, 3
      %v1410 = vsel %vm586, %v1408, %v1409
      %v1411 = vrot.slane %v883, 3
      %v1412 = vrot.slane %v886, 3
      %v1413 = vsel %vm586, %v1411, %v1412
      %v1415 = vsel %vm1016, %v1413, 0
      %v1418 = vsel %vm499, %v1406, 0
      %v1421 = vsel %vm499, %v1407, 0
      %1423 = vmatpush.msra.mxu0 %v1380
      %1424 = vmatpush.msra.mxu0 %v1378
      %1425 = vmatpush.msra.mxu0 %v1376
      %1426 = vmatpush.msra.mxu0 %v1374
      %1427 = vmatpush.msra.mxu0 %v1372
      %1428 = vmatpush.msra.mxu0 %v1370
      %1429 = vmatpush.msra.mxu0 %v1368
      %1430 = vmatpush.msra.mxu0 %v1366
      %1431 = vmatpush.msra.mxu0 %v1364
      %1432 = vmatpush.msra.mxu0 %v1362
      %1433 = vmatpush.msra.mxu0 %v1360
      %1434 = vmatpush.msra.mxu0 %v1358
      %1435 = vmatpush.msra.mxu0 %v1356
      %1436 = vmatpush.msra.mxu0 %v1354
      %1437 = vmatpush.msra.mxu0 %v1352
      %1438 = vmatpush.msra.mxu0 %v1350
      %1439 = vmatmul.f32.gmra.mxu0 %v1410
      %v1440 = vpop.f32.mrf.mxu0
      %v1441 = vadd.f32 0.0, %v1440
      %1442 = vdwg.mxu0
      %1443 = vmatpush.msra.mxu0 0.0
      %1444 = vmatpush.msra.mxu0 0.0
      %1445 = vmatpush.msra.mxu0 0.0
      %1446 = vmatpush.msra.mxu0 %v1418
      %1447 = vmatpush.msra.mxu0 %v1404
      %1448 = vmatpush.msra.mxu0 %v1402
      %1449 = vmatpush.msra.mxu0 %v1400
      %1450 = vmatpush.msra.mxu0 %v1398
      %1451 = vmatpush.msra.mxu0 %v1396
      %1452 = vmatpush.msra.mxu0 %v1394
      %1453 = vmatpush.msra.mxu0 %v1392
      %1454 = vmatpush.msra.mxu0 %v1390
      %1455 = vmatpush.msra.mxu0 %v1388
      %1456 = vmatpush.msra.mxu0 %v1386
      %1457 = vmatpush.msra.mxu0 %v1384
      %1458 = vmatpush.msra.mxu0 %v1382
      %1459 = vmatmul.f32.gmra.mxu0 %v1415
      %v1460 = vpop.f32.mrf.mxu0
      %v1461 = vadd.f32 %v1441, %v1460
      %1462 = vdwg.mxu0
      %1463 = vmatpush.msra.mxu0 %v1381
      %1464 = vmatpush.msra.mxu0 %v1379
      %1465 = vmatpush.msra.mxu0 %v1377
      %1466 = vmatpush.msra.mxu0 %v1375
      %1467 = vmatpush.msra.mxu0 %v1373
      %1468 = vmatpush.msra.mxu0 %v1371
      %1469 = vmatpush.msra.mxu0 %v1369
      %1470 = vmatpush.msra.mxu0 %v1367
      %1471 = vmatpush.msra.mxu0 %v1365
      %1472 = vmatpush.msra.mxu0 %v1363
      %1473 = vmatpush.msra.mxu0 %v1361
      %1474 = vmatpush.msra.mxu0 %v1359
      %1475 = vmatpush.msra.mxu0 %v1357
      %1476 = vmatpush.msra.mxu0 %v1355
      %1477 = vmatpush.msra.mxu0 %v1353
      %1478 = vmatpush.msra.mxu0 %v1351
      %1479 = vmatmul.f32.gmra.mxu0 %v1410
      %v1480 = vpop.f32.mrf.mxu0
      %v1481 = vadd.f32 0.0, %v1480
      %1482 = vdwg.mxu0
      %1483 = vmatpush.msra.mxu0 0.0
      %1484 = vmatpush.msra.mxu0 0.0
      %1485 = vmatpush.msra.mxu0 0.0
      %1486 = vmatpush.msra.mxu0 %v1421
      %1487 = vmatpush.msra.mxu0 %v1405
      %1488 = vmatpush.msra.mxu0 %v1403
      %1489 = vmatpush.msra.mxu0 %v1401
      %1490 = vmatpush.msra.mxu0 %v1399
      %1491 = vmatpush.msra.mxu0 %v1397
      %1492 = vmatpush.msra.mxu0 %v1395
      %1493 = vmatpush.msra.mxu0 %v1393
      %1494 = vmatpush.msra.mxu0 %v1391
      %1495 = vmatpush.msra.mxu0 %v1389
      %1496 = vmatpush.msra.mxu0 %v1387
      %1497 = vmatpush.msra.mxu0 %v1385
      %1498 = vmatpush.msra.mxu0 %v1383
      %1499 = vmatmul.f32.gmra.mxu0 %v1415
      %v1500 = vpop.f32.mrf.mxu0
      %v1501 = vadd.f32 %v1481, %v1500
      %1502 = vdwg.mxu0
      %v1503 = vadd.f32 %v1347, %v1461
      %v1504 = vadd.f32 %v1348, %v1501
      %s1505 = scalar_lea.vmem %s3, 1856
      %v1506 = vld [vmem:[%s1505] sm:$0xff]
      %v1507 = vld [vmem:[%s1505 + $0x8] sm:$0xff]
      %v1508 = vld [vmem:[%s1505 + $0x10] sm:$0xff]
      %v1509 = vld [vmem:[%s1505 + $0x18] sm:$0xff]
      %v1510 = vld [vmem:[%s1505 + $0x20] sm:$0xff]
      %v1511 = vld [vmem:[%s1505 + $0x28] sm:$0xff]
      %v1512 = vld [vmem:[%s1505 + $0x30] sm:$0xff]
      %v1513 = vld [vmem:[%s1505 + $0x38] sm:$0xff]
      %v1514 = vld [vmem:[%s1505 + $0x40] sm:$0xff]
      %v1515 = vld [vmem:[%s1505 + $0x48] sm:$0xff]
      %v1516 = vld [vmem:[%s1505 + $0x50] sm:$0xff]
      %v1517 = vld [vmem:[%s1505 + $0x58] sm:$0xff]
      %v1518 = vld [vmem:[%s1505 + $0x60] sm:$0xff]
      %v1519 = vld [vmem:[%s1505 + $0x68] sm:$0xff]
      %v1520 = vld [vmem:[%s1505 + $0x70] sm:$0xff]
      %v1521 = vld [vmem:[%s1505 + $0x78] sm:$0xff]
      %v1522 = vld [vmem:[%s1505 + $0x80] sm:$0xff]
      %v1523 = vld [vmem:[%s1505 + $0x88] sm:$0xff]
      %v1524 = vld [vmem:[%s1505 + $0x90] sm:$0xff]
      %v1525 = vld [vmem:[%s1505 + $0x98] sm:$0xff]
      %v1526 = vld [vmem:[%s1505 + $0xa0] sm:$0xff]
      %v1527 = vld [vmem:[%s1505 + $0xa8] sm:$0xff]
      %v1528 = vld [vmem:[%s1505 + $0xb0] sm:$0xff]
      %v1529 = vld [vmem:[%s1505 + $0xb8] sm:$0xff]
      %v1530 = vld [vmem:[%s1505 + $0xc0] sm:$0xff]
      %v1531 = vld [vmem:[%s1505 + $0xc8] sm:$0xff]
      %v1532 = vld [vmem:[%s1505 + $0xd0] sm:$0xff]
      %v1533 = vld [vmem:[%s1505 + $0xd8] sm:$0xff]
      %v1534 = vld [vmem:[%s1505 + $0xe0] sm:$0xff]
      %v1535 = vld [vmem:[%s1505 + $0xe8] sm:$0xff]
      %v1536 = vld [vmem:[%s1505 + $0xf0] sm:$0xff]
      %v1537 = vld [vmem:[%s1505 + $0xf8] sm:$0xff]
      %v1538 = vld [vmem:[%s1505 + $0x100] sm:$0xff]
      %v1539 = vld [vmem:[%s1505 + $0x108] sm:$0xff]
      %v1540 = vld [vmem:[%s1505 + $0x110] sm:$0xff]
      %v1541 = vld [vmem:[%s1505 + $0x118] sm:$0xff]
      %v1542 = vld [vmem:[%s1505 + $0x120] sm:$0xff]
      %v1543 = vld [vmem:[%s1505 + $0x128] sm:$0xff]
      %v1544 = vld [vmem:[%s1505 + $0x130] sm:$0xff]
      %v1545 = vld [vmem:[%s1505 + $0x138] sm:$0xff]
      %v1546 = vld [vmem:[%s1505 + $0x140] sm:$0xff]
      %v1547 = vld [vmem:[%s1505 + $0x148] sm:$0xff]
      %v1548 = vld [vmem:[%s1505 + $0x150] sm:$0xff]
      %v1549 = vld [vmem:[%s1505 + $0x158] sm:$0xff]
      %v1550 = vld [vmem:[%s1505 + $0x160] sm:$0xff]
      %v1551 = vld [vmem:[%s1505 + $0x168] sm:$0xff]
      %v1552 = vld [vmem:[%s1505 + $0x170] sm:$0xff]
      %v1553 = vld [vmem:[%s1505 + $0x178] sm:$0xff]
      %v1554 = vld [vmem:[%s1505 + $0x180] sm:$0xff]
      %v1555 = vld [vmem:[%s1505 + $0x188] sm:$0xff]
      %v1556 = vld [vmem:[%s1505 + $0x190] sm:$0xff]
      %v1557 = vld [vmem:[%s1505 + $0x198] sm:$0xff]
      %v1558 = vld [vmem:[%s1505 + $0x1a0] sm:$0xff]
      %v1559 = vld [vmem:[%s1505 + $0x1a8] sm:$0xff]
      %v1560 = vld [vmem:[%s1505 + $0x1b0] sm:$0xff]
      %v1561 = vld [vmem:[%s1505 + $0x1b8] sm:$0xff]
      %v1562 = vld [vmem:[%s1505 + $0x1c0] sm:$0x3f]
      %v1563 = vld [vmem:[%s1505 + $0x1c8] sm:$0x3f]
      %v1564 = vrot.slane %v860, 4
      %v1565 = vrot.slane %v863, 4
      %v1566 = vsel %vm367, %v1564, %v1565
      %v1567 = vrot.slane %v883, 4
      %v1568 = vrot.slane %v886, 4
      %v1569 = vsel %vm367, %v1567, %v1568
      %v1571 = vsel %vm1016, %v1569, 0
      %v1574 = vsel %vm499, %v1562, 0
      %v1577 = vsel %vm499, %v1563, 0
      %1579 = vmatpush.msra.mxu0 %v1536
      %1580 = vmatpush.msra.mxu0 %v1534
      %1581 = vmatpush.msra.mxu0 %v1532
      %1582 = vmatpush.msra.mxu0 %v1530
      %1583 = vmatpush.msra.mxu0 %v1528
      %1584 = vmatpush.msra.mxu0 %v1526
      %1585 = vmatpush.msra.mxu0 %v1524
      %1586 = vmatpush.msra.mxu0 %v1522
      %1587 = vmatpush.msra.mxu0 %v1520
      %1588 = vmatpush.msra.mxu0 %v1518
      %1589 = vmatpush.msra.mxu0 %v1516
      %1590 = vmatpush.msra.mxu0 %v1514
      %1591 = vmatpush.msra.mxu0 %v1512
      %1592 = vmatpush.msra.mxu0 %v1510
      %1593 = vmatpush.msra.mxu0 %v1508
      %1594 = vmatpush.msra.mxu0 %v1506
      %1595 = vmatmul.f32.gmra.mxu0 %v1566
      %v1596 = vpop.f32.mrf.mxu0
      %v1597 = vadd.f32 0.0, %v1596
      %1598 = vdwg.mxu0
      %1599 = vmatpush.msra.mxu0 0.0
      %1600 = vmatpush.msra.mxu0 0.0
      %1601 = vmatpush.msra.mxu0 0.0
      %1602 = vmatpush.msra.mxu0 %v1574
      %1603 = vmatpush.msra.mxu0 %v1560
      %1604 = vmatpush.msra.mxu0 %v1558
      %1605 = vmatpush.msra.mxu0 %v1556
      %1606 = vmatpush.msra.mxu0 %v1554
      %1607 = vmatpush.msra.mxu0 %v1552
      %1608 = vmatpush.msra.mxu0 %v1550
      %1609 = vmatpush.msra.mxu0 %v1548
      %1610 = vmatpush.msra.mxu0 %v1546
      %1611 = vmatpush.msra.mxu0 %v1544
      %1612 = vmatpush.msra.mxu0 %v1542
      %1613 = vmatpush.msra.mxu0 %v1540
      %1614 = vmatpush.msra.mxu0 %v1538
      %1615 = vmatmul.f32.gmra.mxu0 %v1571
      %v1616 = vpop.f32.mrf.mxu0
      %v1617 = vadd.f32 %v1597, %v1616
      %1618 = vdwg.mxu0
      %1619 = vmatpush.msra.mxu0 %v1537
      %1620 = vmatpush.msra.mxu0 %v1535
      %1621 = vmatpush.msra.mxu0 %v1533
      %1622 = vmatpush.msra.mxu0 %v1531
      %1623 = vmatpush.msra.mxu0 %v1529
      %1624 = vmatpush.msra.mxu0 %v1527
      %1625 = vmatpush.msra.mxu0 %v1525
      %1626 = vmatpush.msra.mxu0 %v1523
      %1627 = vmatpush.msra.mxu0 %v1521
      %1628 = vmatpush.msra.mxu0 %v1519
      %1629 = vmatpush.msra.mxu0 %v1517
      %1630 = vmatpush.msra.mxu0 %v1515
      %1631 = vmatpush.msra.mxu0 %v1513
      %1632 = vmatpush.msra.mxu0 %v1511
      %1633 = vmatpush.msra.mxu0 %v1509
      %1634 = vmatpush.msra.mxu0 %v1507
      %1635 = vmatmul.f32.gmra.mxu0 %v1566
      %v1636 = vpop.f32.mrf.mxu0
      %v1637 = vadd.f32 0.0, %v1636
      %1638 = vdwg.mxu0
      %1639 = vmatpush.msra.mxu0 0.0
      %1640 = vmatpush.msra.mxu0 0.0
      %1641 = vmatpush.msra.mxu0 0.0
      %1642 = vmatpush.msra.mxu0 %v1577
      %1643 = vmatpush.msra.mxu0 %v1561
      %1644 = vmatpush.msra.mxu0 %v1559
      %1645 = vmatpush.msra.mxu0 %v1557
      %1646 = vmatpush.msra.mxu0 %v1555
      %1647 = vmatpush.msra.mxu0 %v1553
      %1648 = vmatpush.msra.mxu0 %v1551
      %1649 = vmatpush.msra.mxu0 %v1549
      %1650 = vmatpush.msra.mxu0 %v1547
      %1651 = vmatpush.msra.mxu0 %v1545
      %1652 = vmatpush.msra.mxu0 %v1543
      %1653 = vmatpush.msra.mxu0 %v1541
      %1654 = vmatpush.msra.mxu0 %v1539
      %1655 = vmatmul.f32.gmra.mxu0 %v1571
      %v1656 = vpop.f32.mrf.mxu0
      %v1657 = vadd.f32 %v1637, %v1656
      %1658 = vdwg.mxu0
      %v1659 = vadd.f32 %v1503, %v1617
      %v1660 = vadd.f32 %v1504, %v1657
      %1663 = vrot.lane.b32.xlu0 %v1659, 108
      %v1664 = vpop.permute.xlu0 %1663
      %1665 = vrot.lane.b32.xlu0 %v1660, 108
      %v1666 = vpop.permute.xlu0 %1665
      %vm1667 = vcmask 883712
      %v1668 = vsel %vm1667, %v1664, %v1666
      %v1671 = vmax.f32 %v1659, %v1668
      %v1672 = vmax.f32 %v1660, %v1666
      %v1675 = vrot.slane %v1671, 1
      %v1676 = vrot.slane %v1672, 1
      %v1679 = vmax.f32 %v1671, %v1675
      %v1680 = vmax.f32 %v1672, %v1676
      %v1682 = vperm.slane %v305, 0
      %v1683 = vperm.slane %v305, 1
      %v1686 = vadd.f32 %v1679, %v1682
      %v1687 = vadd.f32 %v1680, %v1683
      %v1688 = vmax.f32 %v1686, 0.0
      %v1689 = vmax.f32 %v1687, 0.0
      %vm1690 = vcmask 56320
      %v1692 = vsel %vm1690, %v308, 0
      %v1695 = vsel %vm352, %v1688, 0
      %v1698 = vsel %vm352, %v1689, 0
      %1700 = vmatpush.msra.mxu0 0.0
      %1701 = vmatpush.msra.mxu0 0.0
      %1702 = vmatpush.msra.mxu0 0.0
      %1703 = vmatpush.msra.mxu0 0.0
      %1704 = vmatpush.msra.mxu0 0.0
      %1705 = vmatpush.msra.mxu0 0.0
      %1706 = vmatpush.msra.mxu0 0.0
      %1707 = vmatpush.msra.mxu0 0.0
      %1708 = vmatpush.msra.mxu0 0.0
      %1709 = vmatpush.msra.mxu0 0.0
      %1710 = vmatpush.msra.mxu0 0.0
      %1711 = vmatpush.msra.mxu0 0.0
      %1712 = vmatpush.msra.mxu0 0.0
      %1713 = vmatpush.msra.mxu0 0.0
      %1714 = vmatpush.msra.mxu0 0.0
      %1715 = vmatpush.msra.mxu0 %v1695
      %1716 = vmatmul.f32.gmra.mxu0 %v1692
      %v1717 = vpop.f32.mrf.mxu0
      %v1718 = vadd.f32 0.0, %v1717
      %1719 = vdwg.mxu0
      %1720 = vmatpush.msra.mxu0 0.0
      %1721 = vmatpush.msra.mxu0 0.0
      %1722 = vmatpush.msra.mxu0 0.0
      %1723 = vmatpush.msra.mxu0 0.0
      %1724 = vmatpush.msra.mxu0 0.0
      %1725 = vmatpush.msra.mxu0 0.0
      %1726 = vmatpush.msra.mxu0 0.0
      %1727 = vmatpush.msra.mxu0 0.0
      %1728 = vmatpush.msra.mxu0 0.0
      %1729 = vmatpush.msra.mxu0 0.0
      %1730 = vmatpush.msra.mxu0 0.0
      %1731 = vmatpush.msra.mxu0 0.0
      %1732 = vmatpush.msra.mxu0 0.0
      %1733 = vmatpush.msra.mxu0 0.0
      %1734 = vmatpush.msra.mxu0 0.0
      %1735 = vmatpush.msra.mxu0 %v1698
      %1736 = vmatmul.f32.gmra.mxu0 %v1692
      %v1737 = vpop.f32.mrf.mxu0
      %v1738 = vadd.f32 0.0, %v1737
      %1739 = vdwg.mxu0
      %vm1740 = vcmask 97280
      %v1742 = vsel %vm1740, %v1738, 0
      %v1745 = vsel %vm367, %v326, 0
      %1747 = vmatpush.msra.mxu0 %v324
      %1748 = vmatpush.msra.mxu0 %v323
      %1749 = vmatpush.msra.mxu0 %v322
      %1750 = vmatpush.msra.mxu0 %v321
      %1751 = vmatpush.msra.mxu0 %v320
      %1752 = vmatpush.msra.mxu0 %v319
      %1753 = vmatpush.msra.mxu0 %v318
      %1754 = vmatpush.msra.mxu0 %v317
      %1755 = vmatpush.msra.mxu0 %v316
      %1756 = vmatpush.msra.mxu0 %v315
      %1757 = vmatpush.msra.mxu0 %v314
      %1758 = vmatpush.msra.mxu0 %v313
      %1759 = vmatpush.msra.mxu0 %v312
      %1760 = vmatpush.msra.mxu0 %v311
      %1761 = vmatpush.msra.mxu0 %v310
      %1762 = vmatpush.msra.mxu0 %v309
      %1763 = vmatmul.f32.gmra.mxu0 %v1718
      %v1764 = vpop.f32.mrf.mxu0
      %v1765 = vadd.f32 0.0, %v1764
      %1766 = vdwg.mxu0
      %1767 = vmatpush.msra.mxu0 0.0
      %1768 = vmatpush.msra.mxu0 0.0
      %1769 = vmatpush.msra.mxu0 0.0
      %1770 = vmatpush.msra.mxu0 0.0
      %1771 = vmatpush.msra.mxu0 0.0
      %1772 = vmatpush.msra.mxu0 0.0
      %1773 = vmatpush.msra.mxu0 0.0
      %1774 = vmatpush.msra.mxu0 0.0
      %1775 = vmatpush.msra.mxu0 0.0
      %1776 = vmatpush.msra.mxu0 0.0
      %1777 = vmatpush.msra.mxu0 0.0
      %1778 = vmatpush.msra.mxu0 0.0
      %1779 = vmatpush.msra.mxu0 0.0
      %1780 = vmatpush.msra.mxu0 0.0
      %1781 = vmatpush.msra.mxu0 %v1745
      %1782 = vmatpush.msra.mxu0 %v325
      %1783 = vmatmul.f32.gmra.mxu0 %v1742
      %v1784 = vpop.f32.mrf.mxu0
      %v1785 = vadd.f32 %v1765, %v1784
      %1786 = vdwg.mxu0
      %vm1787 = vcmask 650240
      %1788 = vst.msk [vmem:[%s303] sm:$0xf] %vm1787, %v1785
      %p1789 = scmp.lt.s32.totalorder %s19, 1
      %s1790 = scalar_select %p1789, %s19, 1
      %s1791 = smul.addr %s1790, 4
      %s1792 = scalar_lea.vmem %s8, %s1791
      // Predicated region
      $region53: #{fed_contrastive_forward.1} parent=51 // pred_check
        %p1793 = pneg %p210
      $region54: #{fed_contrastive_forward.1} parent=51 // pred_check_branch
        %1795 = sbr.rel (%p1793) target = $region56
      $region55: #{fed_contrastive_forward.1} parent=51 // pred_region
        _
      $region56: #{fed_contrastive_forward.1} parent=51 // pred_fallthru
        _
    $region52: #{fed_contrastive_forward.1} parent=5 // pred_fallthru
      _
    %p1796 = scmp.le.s32.totalorder 2, %s14
    // Predicated region
    $region57: #{fed_contrastive_forward.1} parent=5 // pred_check
      %p1797 = pneg %p1796
    $region58: #{fed_contrastive_forward.1} parent=5 // pred_check_branch
      %1799 = sbr.rel (%p1797) target = $region60
    $region59: #{fed_contrastive_forward.1} parent=5 // pred_region
      %s1800 = ssub.s32 %s14, 2
      // Predicated region
      $region61: #{fed_contrastive_forward.1} parent=59 // pred_check
        %p1801 = pneg %p216
      $region62: #{fed_contrastive_forward.1} parent=59 // pred_check_branch
        %1803 = sbr.rel (%p1801) target = $region64
      $region63: #{fed_contrastive_forward.1} parent=59 // pred_region
        %p1804 = scmp.lt.s32.totalorder %s20, 1
        %s1805 = scalar_select %p1804, %s20, 1
        %s1806 = smul.addr %s1805, 4
        %s1807 = scalar_lea.vmem %s8, %s1806
      $region64: #{fed_contrastive_forward.1} parent=59 // pred_fallthru
        _
    $region60: #{fed_contrastive_forward.1} parent=5 // pred_fallthru
      _
  $region6: #{fed_contrastive_forward.1} parent=0 // loop_footer
    %s18 = sadd.s32 1, %s14
  $region7: #{fed_contrastive_forward.1} parent=0 // loop_footer_branch
    %13 = sbr.rel target = $region3
  $region8: #{fed_contrastive_forward.1} parent=0 // loop_exit
    _

</llo_original>
